<compile_context>
chip_gen: v5e
topology: v5e:2x2
jax: 0.10.0
libtpu: 0.0.40
codegen_flags: <defaults>
</compile_context>

<pallas_src>
import functools
import math

import jax
import jax.numpy as jnp
from jax.experimental import pallas as pl
from jax.experimental.pallas import tpu as pltpu


# ----------------------------- fused AoA kernel ------------------------------
def _aoa_kernel(x_ref, ctx_ref, wq_ref, wk_ref, wv_ref, wo_att_ref, wo_q_ref,
                b_ref, o_ref, *, heads, scale):
    bt, n, dim = x_ref.shape
    m = ctx_ref.shape[1]
    dim_out = o_ref.shape[-1]

    # Invariant weights: load once per grid step (already bf16 in HBM).
    wq = wq_ref[...]           # (H, dim, dh)
    wk = wk_ref[...]           # (H, dim, dh)
    wv = wv_ref[...]           # (H, dim, dh)
    wo_att = wo_att_ref[...]   # (H, dh, 2*dim)   AoA rows for attn_out part
    wo_q = wo_q_ref[...]       # (H, dh, 2*dim)   AoA rows for q part
    bias = b_ref[...]          # (1, 2*dim) f32

    for b in range(bt):        # short static unroll over the batch tile
        xb = x_ref[b].astype(jnp.bfloat16)      # (N, dim)
        cb = ctx_ref[b].astype(jnp.bfloat16)    # (M, dim)
        xh = jnp.broadcast_to(xb, (heads, n, dim))
        ch = jnp.broadcast_to(cb, (heads, m, dim))

        # Head-batched projections (bf16 MXU path, f32 accumulation).
        q = jnp.einsum('hnd,hde->hne', xh, wq,
                       preferred_element_type=jnp.float32)   # (H, N, dh)
        k = jnp.einsum('hmd,hde->hme', ch, wk,
                       preferred_element_type=jnp.float32)   # (H, M, dh)
        v = jnp.einsum('hmd,hde->hme', ch, wv,
                       preferred_element_type=jnp.float32)   # (H, M, dh)
        q_bf = q.astype(jnp.bfloat16)

        # Scaled dot-product attention for all heads at once.
        dots = jnp.einsum('hne,hme->hnm', q_bf, k.astype(jnp.bfloat16),
                          preferred_element_type=jnp.float32) * scale
        dots = dots - jnp.max(dots, axis=-1, keepdims=True)
        p = jnp.exp(dots)
        p = p * pl.reciprocal(jnp.sum(p, axis=-1, keepdims=True), approx=False)
        att = jnp.einsum('hnm,hme->hne', p.astype(jnp.bfloat16),
                         v.astype(jnp.bfloat16),
                         preferred_element_type=jnp.float32)  # (H, N, dh)

        # AoA pre-activation: cat((attn_out, q), -1) @ Waoa^T + b, computed as
        # two head-batched matmuls, then reduced over the (leading) heads axis.
        pre = jnp.einsum('hne,heo->hno', att.astype(jnp.bfloat16), wo_att,
                         preferred_element_type=jnp.float32)
        pre = pre + jnp.einsum('hne,heo->hno', q_bf, wo_q,
                               preferred_element_type=jnp.float32)
        pre = jnp.sum(pre, axis=0) + bias                     # (N, 2*dim) f32

        # GLU: first half * sigmoid(second half).
        gate = jax.nn.sigmoid(pre[:, dim_out:])
        o_ref[b] = (pre[:, :dim_out] * gate).astype(o_ref.dtype)


def aoa_forward(params, x, context=None, *, heads, dim_head, batch_tile=None):
    """Forward pass matching AttentionOnAttention.forward (dropout = identity)."""
    if context is None:
        context = x
    B, N, dim = x.shape
    _, M, _ = context.shape
    dh = dim_head
    inner = heads * dh

    # ---- host-side weight prep: per-head layout, bf16 (halves weight DMA and
    #      keeps the MXU on its native bf16 path; accumulation stays f32). ----
    w_q = params["w_q"]        # (inner, dim)
    w_kv = params["w_kv"]      # (2*inner, dim)   rows = [k | v]
    w_aoa = params["w_aoa"]    # (2*dim, 2*inner) cols = [attn_out | q]

    wq_h = w_q.reshape(heads, dh, dim).transpose(0, 2, 1).astype(jnp.bfloat16)
    wk_h = w_kv[:inner].reshape(heads, dh, dim).transpose(0, 2, 1).astype(jnp.bfloat16)
    wv_h = w_kv[inner:].reshape(heads, dh, dim).transpose(0, 2, 1).astype(jnp.bfloat16)
    wo_att_h = w_aoa[:, :inner].T.reshape(heads, dh, 2 * dim).astype(jnp.bfloat16)
    wo_q_h = w_aoa[:, inner:].T.reshape(heads, dh, 2 * dim).astype(jnp.bfloat16)
    b_aoa = params["b_aoa"].reshape(1, 2 * dim).astype(jnp.float32)

    # ---- batch tiling: several batch elements per grid step to amortize the
    #      ~0.35 us per-step pipeline overhead. ----
    if batch_tile is None:
        bt = 1
        for cand in range(1, min(B, 8) + 1):
            if B % cand == 0:
                bt = cand
    else:
        bt = batch_tile
    assert B % bt == 0, "batch_tile must divide the batch size"
    grid = (B // bt,)

    kernel = functools.partial(_aoa_kernel, heads=heads, scale=dh ** -0.5)

    flops_per_b = (2 * N * dim * inner            # q projection
                   + 2 * 2 * M * dim * inner      # k, v projections
                   + 2 * N * M * inner            # q @ k^T (all heads)
                   + 2 * N * M * inner            # p @ v   (all heads)
                   + 2 * 2 * N * inner * 2 * dim)  # AoA (attn_out + q parts)
    weight_bytes = 2 * (wq_h.size + wk_h.size + wv_h.size
                        + wo_att_h.size + wo_q_h.size) + 4 * b_aoa.size
    cost = pl.CostEstimate(
        flops=B * flops_per_b,
        transcendentals=B * (heads * N * M + N * dim),
        bytes_accessed=(x.size * x.dtype.itemsize
                        + context.size * context.dtype.itemsize
                        + weight_bytes
                        + B * N * dim * x.dtype.itemsize))

    return pl.pallas_call(
        kernel,
        out_shape=jax.ShapeDtypeStruct((B, N, dim), x.dtype),
        grid=grid,
        in_specs=[
            pl.BlockSpec((bt, N, dim), lambda g: (g, 0, 0)),
            pl.BlockSpec((bt, M, dim), lambda g: (g, 0, 0)),
            pl.BlockSpec((heads, dim, dh), lambda g: (0, 0, 0)),
            pl.BlockSpec((heads, dim, dh), lambda g: (0, 0, 0)),
            pl.BlockSpec((heads, dim, dh), lambda g: (0, 0, 0)),
            pl.BlockSpec((heads, dh, 2 * dim), lambda g: (0, 0, 0)),
            pl.BlockSpec((heads, dh, 2 * dim), lambda g: (0, 0, 0)),
            pl.BlockSpec((1, 2 * dim), lambda g: (0, 0)),
        ],
        out_specs=pl.BlockSpec((bt, N, dim), lambda g: (g, 0, 0)),
        compiler_params=pltpu.CompilerParams(
            dimension_semantics=("parallel",)),
        cost_estimate=cost,
    )(x, context, wq_h, wk_h, wv_h, wo_att_h, wo_q_h, b_aoa)


# --------------------------------- reference ----------------------------------
def aoa_reference(params, x, context=None, *, heads, dim_head):
    if context is None:
        context = x
    B, N, dim = x.shape
    inner = heads * dim_head

    q_ = x @ params["w_q"].T                         # (B, N, inner)
    kv = context @ params["w_kv"].T                  # (B, M, 2*inner)
    k_, v_ = kv[..., :inner], kv[..., inner:]

    def split(t):
        b, n, _ = t.shape
        return t.reshape(b, n, heads, dim_head).transpose(0, 2, 1, 3)

    q, k, v = split(q_), split(k_), split(v_)
    dots = jnp.einsum("bhid,bhjd->bhij", q, k) * (dim_head ** -0.5)
    attn = jax.nn.softmax(dots, axis=-1)
    attn_out = jnp.einsum("bhij,bhjd->bhid", attn, v)
    out = attn_out.transpose(0, 2, 1, 3).reshape(B, N, inner)
    heads_cat = jnp.concatenate([out, q_], axis=-1)  # (B, N, 2*inner)
    pre = heads_cat @ params["w_aoa"].T + params["b_aoa"]
    a, g = pre[..., :dim], pre[..., dim:]
    return a * jax.nn.sigmoid(g)                     # GLU


# ------------------------------------ main -------------------------------------
if __name__ == "__main__":
    # Small shapes consistent with the module: dim=32, heads=4, dim_head=8,
    # batch=2, seq=8  (inner_dim = 32).
    B, N, dim = 2, 8, 32
    heads, dim_head = 4, 8
    inner = heads * dim_head

    key = jax.random.PRNGKey(0)
    ks = jax.random.split(key, 6)

    def init(k, shape, fan_in):
        bound = 1.0 / math.sqrt(fan_in)
        return (jax.random.uniform(k, shape, jnp.float32) * 2.0 - 1.0) * bound

    params = {
        "w_q": init(ks[0], (inner, dim), dim),             # to_q  (no bias)
        "w_kv": init(ks[1], (2 * inner, dim), dim),        # to_kv (no bias)
        "w_aoa": init(ks[2], (2 * dim, 2 * inner), 2 * inner),
        "b_aoa": init(ks[3], (2 * dim,), 2 * inner),
    }

    x = jax.random.normal(ks[4], (B, N, dim), jnp.float32)

    out = aoa_forward(params, x, heads=heads, dim_head=dim_head)
    out = jax.block_until_ready(out)

    ref = aoa_reference(params, x, heads=heads, dim_head=dim_head)
    assert out.shape == (B, N, dim)
    # Kernel runs its matmuls with bf16 operands (f32 accumulation), so compare
    # against the f32 reference with a bf16-appropriate tolerance.
    err = float(jnp.max(jnp.abs(out - ref)))
    assert jnp.allclose(out, ref, atol=3e-2, rtol=3e-2), f"mismatch vs reference (max abs err {err})"

    print("KERNEL_OK")
</pallas_src>

<mosaic_0001>
module attributes {stable_mosaic.version = 11 : i64} {
  func.func @_aoa_kernel(%arg0: i32, %arg1: memref<2x8x32xf32, #tpu.memory_space<vmem>>, %arg2: memref<2x8x32xf32, #tpu.memory_space<vmem>>, %arg3: memref<4x32x8xbf16, #tpu.memory_space<vmem>>, %arg4: memref<4x32x8xbf16, #tpu.memory_space<vmem>>, %arg5: memref<4x32x8xbf16, #tpu.memory_space<vmem>>, %arg6: memref<4x8x64xbf16, #tpu.memory_space<vmem>>, %arg7: memref<4x8x64xbf16, #tpu.memory_space<vmem>>, %arg8: memref<1x64xf32, #tpu.memory_space<vmem>>, %arg9: memref<2x8x32xf32, #tpu.memory_space<vmem>>) attributes {dimension_semantics = [#tpu.dimension_semantics<parallel>], iteration_bounds = array<i64: 1>, scalar_prefetch = 0 : i64, scratch_operands = 0 : i64, tpu.core_type = #tpu.core_type<tc>, window_params = [{transform_indices = @transform_0, window_bounds = array<i64: 2, 8, 32>}, {transform_indices = @transform_1, window_bounds = array<i64: 2, 8, 32>}, {pipeline_mode = #tpu.pipeline_mode<synchronous>, transform_indices = @transform_2, window_bounds = array<i64: 4, 32, 8>}, {pipeline_mode = #tpu.pipeline_mode<synchronous>, transform_indices = @transform_3, window_bounds = array<i64: 4, 32, 8>}, {pipeline_mode = #tpu.pipeline_mode<synchronous>, transform_indices = @transform_4, window_bounds = array<i64: 4, 32, 8>}, {pipeline_mode = #tpu.pipeline_mode<synchronous>, transform_indices = @transform_5, window_bounds = array<i64: 4, 8, 64>}, {pipeline_mode = #tpu.pipeline_mode<synchronous>, transform_indices = @transform_6, window_bounds = array<i64: 4, 8, 64>}, {pipeline_mode = #tpu.pipeline_mode<synchronous>, transform_indices = @transform_7, window_bounds = array<i64: 1, 64>}, {transform_indices = @transform_8, window_bounds = array<i64: 2, 8, 32>}]} {
    %c0 = arith.constant 0 : index
    %c0_0 = arith.constant 0 : index
    %c0_1 = arith.constant 0 : index
    %0 = vector.load %arg3[%c0, %c0_0, %c0_1] : memref<4x32x8xbf16, #tpu.memory_space<vmem>>, vector<4x32x8xbf16>
    %c0_2 = arith.constant 0 : index
    %c0_3 = arith.constant 0 : index
    %c0_4 = arith.constant 0 : index
    %1 = vector.load %arg4[%c0_2, %c0_3, %c0_4] : memref<4x32x8xbf16, #tpu.memory_space<vmem>>, vector<4x32x8xbf16>
    %c0_5 = arith.constant 0 : index
    %c0_6 = arith.constant 0 : index
    %c0_7 = arith.constant 0 : index
    %2 = vector.load %arg5[%c0_5, %c0_6, %c0_7] : memref<4x32x8xbf16, #tpu.memory_space<vmem>>, vector<4x32x8xbf16>
    %c0_8 = arith.constant 0 : index
    %c0_9 = arith.constant 0 : index
    %c0_10 = arith.constant 0 : index
    %3 = vector.load %arg6[%c0_8, %c0_9, %c0_10] : memref<4x8x64xbf16, #tpu.memory_space<vmem>>, vector<4x8x64xbf16>
    %c0_11 = arith.constant 0 : index
    %c0_12 = arith.constant 0 : index
    %c0_13 = arith.constant 0 : index
    %4 = vector.load %arg7[%c0_11, %c0_12, %c0_13] : memref<4x8x64xbf16, #tpu.memory_space<vmem>>, vector<4x8x64xbf16>
    %c0_14 = arith.constant 0 : index
    %c0_15 = arith.constant 0 : index
    %5 = vector.load %arg8[%c0_14, %c0_15] : memref<1x64xf32, #tpu.memory_space<vmem>>, vector<1x64xf32>
    %c0_16 = arith.constant 0 : index
    %c0_17 = arith.constant 0 : index
    %c0_18 = arith.constant 0 : index
    %6 = vector.load %arg1[%c0_16, %c0_17, %c0_18] : memref<2x8x32xf32, #tpu.memory_space<vmem>>, vector<1x8x32xf32>
    %7 = vector.shape_cast %6 : vector<1x8x32xf32> to vector<8x32xf32>
    %8 = arith.truncf %7 : vector<8x32xf32> to vector<8x32xbf16>
    %c0_19 = arith.constant 0 : index
    %c0_20 = arith.constant 0 : index
    %c0_21 = arith.constant 0 : index
    %9 = vector.load %arg2[%c0_19, %c0_20, %c0_21] : memref<2x8x32xf32, #tpu.memory_space<vmem>>, vector<1x8x32xf32>
    %10 = vector.shape_cast %9 : vector<1x8x32xf32> to vector<8x32xf32>
    %11 = arith.truncf %10 : vector<8x32xf32> to vector<8x32xbf16>
    %12 = vector.shape_cast %8 : vector<8x32xbf16> to vector<1x8x32xbf16>
    %13 = vector.broadcast %12 : vector<1x8x32xbf16> to vector<4x8x32xbf16>
    %14 = vector.shape_cast %11 : vector<8x32xbf16> to vector<1x8x32xbf16>
    %15 = vector.broadcast %14 : vector<1x8x32xbf16> to vector<4x8x32xbf16>
    "tpu.trace_start"() <{level = 10 : i32, message = "hnd,hde->hne"}> : () -> ()
    %cst = arith.constant dense<0.000000e+00> : vector<4x8x8xf32>
    %16 = tpu.matmul %13, %0, %cst {dimension_numbers = #tpu.dot_dimension_numbers<[2], [1], [1], [2], [0, 0, 0, 1, 1, 2], [0], [0]>} : vector<4x8x32xbf16>, vector<4x32x8xbf16>, vector<4x8x8xf32> -> vector<4x8x8xf32>
    "tpu.trace_stop"() : () -> ()
    "tpu.trace_start"() <{level = 10 : i32, message = "hmd,hde->hme"}> : () -> ()
    %cst_22 = arith.constant dense<0.000000e+00> : vector<4x8x8xf32>
    %17 = tpu.matmul %15, %1, %cst_22 {dimension_numbers = #tpu.dot_dimension_numbers<[2], [1], [1], [2], [0, 0, 0, 1, 1, 2], [0], [0]>} : vector<4x8x32xbf16>, vector<4x32x8xbf16>, vector<4x8x8xf32> -> vector<4x8x8xf32>
    %cst_23 = arith.constant dense<0.000000e+00> : vector<4x8x8xf32>
    %18 = tpu.matmul %15, %2, %cst_23 {dimension_numbers = #tpu.dot_dimension_numbers<[2], [1], [1], [2], [0, 0, 0, 1, 1, 2], [0], [0]>} : vector<4x8x32xbf16>, vector<4x32x8xbf16>, vector<4x8x8xf32> -> vector<4x8x8xf32>
    "tpu.trace_stop"() : () -> ()
    %19 = arith.truncf %16 : vector<4x8x8xf32> to vector<4x8x8xbf16>
    %20 = arith.truncf %17 : vector<4x8x8xf32> to vector<4x8x8xbf16>
    "tpu.trace_start"() <{level = 10 : i32, message = "hne,hme->hnm"}> : () -> ()
    %cst_24 = arith.constant dense<0.000000e+00> : vector<4x8x8xf32>
    %21 = tpu.matmul %19, %20, %cst_24 {dimension_numbers = #tpu.dot_dimension_numbers<[2], [2], [1], [1], [0, 0, 0, 1, 1, 1], [0], [0]>} : vector<4x8x8xbf16>, vector<4x8x8xbf16>, vector<4x8x8xf32> -> vector<4x8x8xf32>
    "tpu.trace_stop"() : () -> ()
    %cst_25 = arith.constant 0.353553385 : f32
    %22 = vector.broadcast %cst_25 : f32 to vector<4x8x8xf32>
    %23 = arith.mulf %21, %22 : vector<4x8x8xf32>
    %cst_26 = arith.constant dense<0xFF800000> : vector<4x8xf32>
    %24 = vector.multi_reduction <maximumf>, %23, %cst_26 [2] : vector<4x8x8xf32> to vector<4x8xf32>
    %25 = vector.shape_cast %24 : vector<4x8xf32> to vector<4x8x1xf32>
    %26 = vector.broadcast %25 : vector<4x8x1xf32> to vector<4x8x8xf32>
    %27 = arith.subf %23, %26 : vector<4x8x8xf32>
    %28 = math.exp %27 : vector<4x8x8xf32>
    %cst_27 = arith.constant dense<0.000000e+00> : vector<4x8xf32>
    %29 = vector.multi_reduction <add>, %28, %cst_27 [2] : vector<4x8x8xf32> to vector<4x8xf32>
    %30 = vector.shape_cast %29 : vector<4x8xf32> to vector<4x8x1xf32>
    %31 = tpu.reciprocal %30 : vector<4x8x1xf32> -> vector<4x8x1xf32>
    %32 = vector.broadcast %31 : vector<4x8x1xf32> to vector<4x8x8xf32>
    %33 = arith.mulf %28, %32 : vector<4x8x8xf32>
    %34 = arith.truncf %33 : vector<4x8x8xf32> to vector<4x8x8xbf16>
    %35 = arith.truncf %18 : vector<4x8x8xf32> to vector<4x8x8xbf16>
    "tpu.trace_start"() <{level = 10 : i32, message = "hnm,hme->hne"}> : () -> ()
    %cst_28 = arith.constant dense<0.000000e+00> : vector<4x8x8xf32>
    %36 = tpu.matmul %34, %35, %cst_28 {dimension_numbers = #tpu.dot_dimension_numbers<[2], [1], [1], [2], [0, 0, 0, 1, 1, 2], [0], [0]>} : vector<4x8x8xbf16>, vector<4x8x8xbf16>, vector<4x8x8xf32> -> vector<4x8x8xf32>
    "tpu.trace_stop"() : () -> ()
    %37 = arith.truncf %36 : vector<4x8x8xf32> to vector<4x8x8xbf16>
    "tpu.trace_start"() <{level = 10 : i32, message = "hne,heo->hno"}> : () -> ()
    %cst_29 = arith.constant dense<0.000000e+00> : vector<4x8x64xf32>
    %38 = tpu.matmul %37, %3, %cst_29 {dimension_numbers = #tpu.dot_dimension_numbers<[2], [1], [1], [2], [0, 0, 0, 1, 1, 2], [0], [0]>} : vector<4x8x8xbf16>, vector<4x8x64xbf16>, vector<4x8x64xf32> -> vector<4x8x64xf32>
    %cst_30 = arith.constant dense<0.000000e+00> : vector<4x8x64xf32>
    %39 = tpu.matmul %19, %4, %cst_30 {dimension_numbers = #tpu.dot_dimension_numbers<[2], [1], [1], [2], [0, 0, 0, 1, 1, 2], [0], [0]>} : vector<4x8x8xbf16>, vector<4x8x64xbf16>, vector<4x8x64xf32> -> vector<4x8x64xf32>
    "tpu.trace_stop"() : () -> ()
    %40 = arith.addf %38, %39 : vector<4x8x64xf32>
    %cst_31 = arith.constant dense<0.000000e+00> : vector<8x64xf32>
    %41 = vector.multi_reduction <add>, %40, %cst_31 [0] : vector<4x8x64xf32> to vector<8x64xf32>
    %42 = vector.broadcast %5 : vector<1x64xf32> to vector<8x64xf32>
    %43 = arith.addf %41, %42 : vector<8x64xf32>
    %44 = vector.extract_strided_slice %43 {offsets = [0, 32], sizes = [8, 32], strides = [1, 1]} : vector<8x64xf32> to vector<8x32xf32>
    %45 = arith.negf %44 : vector<8x32xf32>
    %46 = math.exp %45 : vector<8x32xf32>
    %cst_32 = arith.constant 1.000000e+00 : f32
    %47 = vector.broadcast %cst_32 : f32 to vector<8x32xf32>
    %48 = arith.addf %47, %46 : vector<8x32xf32>
    %49 = arith.divf %47, %48 : vector<8x32xf32>
    %50 = vector.extract_strided_slice %43 {offsets = [0, 0], sizes = [8, 32], strides = [1, 1]} : vector<8x64xf32> to vector<8x32xf32>
    %51 = arith.mulf %50, %49 : vector<8x32xf32>
    %c0_33 = arith.constant 0 : index
    %c0_34 = arith.constant 0 : index
    %c0_35 = arith.constant 0 : index
    %52 = vector.load %arg9[%c0_33, %c0_34, %c0_35] : memref<2x8x32xf32, #tpu.memory_space<vmem>>, vector<1x8x32xf32>
    %53 = vector.shape_cast %52 : vector<1x8x32xf32> to vector<8x32xf32>
    %54 = vector.shape_cast %51 : vector<8x32xf32> to vector<1x8x32xf32>
    tpu.vector_store %arg9[%c0_33, %c0_34, %c0_35], %54 {strides = array<i32>} : memref<2x8x32xf32, #tpu.memory_space<vmem>>, vector<1x8x32xf32>,
    %c1 = arith.constant 1 : index
    %c0_36 = arith.constant 0 : index
    %c0_37 = arith.constant 0 : index
    %55 = vector.load %arg1[%c1, %c0_36, %c0_37] : memref<2x8x32xf32, #tpu.memory_space<vmem>>, vector<1x8x32xf32>
    %56 = vector.shape_cast %55 : vector<1x8x32xf32> to vector<8x32xf32>
    %57 = arith.truncf %56 : vector<8x32xf32> to vector<8x32xbf16>
    %c1_38 = arith.constant 1 : index
    %c0_39 = arith.constant 0 : index
    %c0_40 = arith.constant 0 : index
    %58 = vector.load %arg2[%c1_38, %c0_39, %c0_40] : memref<2x8x32xf32, #tpu.memory_space<vmem>>, vector<1x8x32xf32>
    %59 = vector.shape_cast %58 : vector<1x8x32xf32> to vector<8x32xf32>
    %60 = arith.truncf %59 : vector<8x32xf32> to vector<8x32xbf16>
    %61 = vector.shape_cast %57 : vector<8x32xbf16> to vector<1x8x32xbf16>
    %62 = vector.broadcast %61 : vector<1x8x32xbf16> to vector<4x8x32xbf16>
    %63 = vector.shape_cast %60 : vector<8x32xbf16> to vector<1x8x32xbf16>
    %64 = vector.broadcast %63 : vector<1x8x32xbf16> to vector<4x8x32xbf16>
    "tpu.trace_start"() <{level = 10 : i32, message = "hnd,hde->hne"}> : () -> ()
    %cst_41 = arith.constant dense<0.000000e+00> : vector<4x8x8xf32>
    %65 = tpu.matmul %62, %0, %cst_41 {dimension_numbers = #tpu.dot_dimension_numbers<[2], [1], [1], [2], [0, 0, 0, 1, 1, 2], [0], [0]>} : vector<4x8x32xbf16>, vector<4x32x8xbf16>, vector<4x8x8xf32> -> vector<4x8x8xf32>
    "tpu.trace_stop"() : () -> ()
    "tpu.trace_start"() <{level = 10 : i32, message = "hmd,hde->hme"}> : () -> ()
    %cst_42 = arith.constant dense<0.000000e+00> : vector<4x8x8xf32>
    %66 = tpu.matmul %64, %1, %cst_42 {dimension_numbers = #tpu.dot_dimension_numbers<[2], [1], [1], [2], [0, 0, 0, 1, 1, 2], [0], [0]>} : vector<4x8x32xbf16>, vector<4x32x8xbf16>, vector<4x8x8xf32> -> vector<4x8x8xf32>
    %cst_43 = arith.constant dense<0.000000e+00> : vector<4x8x8xf32>
    %67 = tpu.matmul %64, %2, %cst_43 {dimension_numbers = #tpu.dot_dimension_numbers<[2], [1], [1], [2], [0, 0, 0, 1, 1, 2], [0], [0]>} : vector<4x8x32xbf16>, vector<4x32x8xbf16>, vector<4x8x8xf32> -> vector<4x8x8xf32>
    "tpu.trace_stop"() : () -> ()
    %68 = arith.truncf %65 : vector<4x8x8xf32> to vector<4x8x8xbf16>
    %69 = arith.truncf %66 : vector<4x8x8xf32> to vector<4x8x8xbf16>
    "tpu.trace_start"() <{level = 10 : i32, message = "hne,hme->hnm"}> : () -> ()
    %cst_44 = arith.constant dense<0.000000e+00> : vector<4x8x8xf32>
    %70 = tpu.matmul %68, %69, %cst_44 {dimension_numbers = #tpu.dot_dimension_numbers<[2], [2], [1], [1], [0, 0, 0, 1, 1, 1], [0], [0]>} : vector<4x8x8xbf16>, vector<4x8x8xbf16>, vector<4x8x8xf32> -> vector<4x8x8xf32>
    "tpu.trace_stop"() : () -> ()
    %cst_45 = arith.constant 0.353553385 : f32
    %71 = vector.broadcast %cst_45 : f32 to vector<4x8x8xf32>
    %72 = arith.mulf %70, %71 : vector<4x8x8xf32>
    %cst_46 = arith.constant dense<0xFF800000> : vector<4x8xf32>
    %73 = vector.multi_reduction <maximumf>, %72, %cst_46 [2] : vector<4x8x8xf32> to vector<4x8xf32>
    %74 = vector.shape_cast %73 : vector<4x8xf32> to vector<4x8x1xf32>
    %75 = vector.broadcast %74 : vector<4x8x1xf32> to vector<4x8x8xf32>
    %76 = arith.subf %72, %75 : vector<4x8x8xf32>
    %77 = math.exp %76 : vector<4x8x8xf32>
    %cst_47 = arith.constant dense<0.000000e+00> : vector<4x8xf32>
    %78 = vector.multi_reduction <add>, %77, %cst_47 [2] : vector<4x8x8xf32> to vector<4x8xf32>
    %79 = vector.shape_cast %78 : vector<4x8xf32> to vector<4x8x1xf32>
    %80 = tpu.reciprocal %79 : vector<4x8x1xf32> -> vector<4x8x1xf32>
    %81 = vector.broadcast %80 : vector<4x8x1xf32> to vector<4x8x8xf32>
    %82 = arith.mulf %77, %81 : vector<4x8x8xf32>
    %83 = arith.truncf %82 : vector<4x8x8xf32> to vector<4x8x8xbf16>
    %84 = arith.truncf %67 : vector<4x8x8xf32> to vector<4x8x8xbf16>
    "tpu.trace_start"() <{level = 10 : i32, message = "hnm,hme->hne"}> : () -> ()
    %cst_48 = arith.constant dense<0.000000e+00> : vector<4x8x8xf32>
    %85 = tpu.matmul %83, %84, %cst_48 {dimension_numbers = #tpu.dot_dimension_numbers<[2], [1], [1], [2], [0, 0, 0, 1, 1, 2], [0], [0]>} : vector<4x8x8xbf16>, vector<4x8x8xbf16>, vector<4x8x8xf32> -> vector<4x8x8xf32>
    "tpu.trace_stop"() : () -> ()
    %86 = arith.truncf %85 : vector<4x8x8xf32> to vector<4x8x8xbf16>
    "tpu.trace_start"() <{level = 10 : i32, message = "hne,heo->hno"}> : () -> ()
    %cst_49 = arith.constant dense<0.000000e+00> : vector<4x8x64xf32>
    %87 = tpu.matmul %86, %3, %cst_49 {dimension_numbers = #tpu.dot_dimension_numbers<[2], [1], [1], [2], [0, 0, 0, 1, 1, 2], [0], [0]>} : vector<4x8x8xbf16>, vector<4x8x64xbf16>, vector<4x8x64xf32> -> vector<4x8x64xf32>
    %cst_50 = arith.constant dense<0.000000e+00> : vector<4x8x64xf32>
    %88 = tpu.matmul %68, %4, %cst_50 {dimension_numbers = #tpu.dot_dimension_numbers<[2], [1], [1], [2], [0, 0, 0, 1, 1, 2], [0], [0]>} : vector<4x8x8xbf16>, vector<4x8x64xbf16>, vector<4x8x64xf32> -> vector<4x8x64xf32>
    "tpu.trace_stop"() : () -> ()
    %89 = arith.addf %87, %88 : vector<4x8x64xf32>
    %cst_51 = arith.constant dense<0.000000e+00> : vector<8x64xf32>
    %90 = vector.multi_reduction <add>, %89, %cst_51 [0] : vector<4x8x64xf32> to vector<8x64xf32>
    %91 = vector.broadcast %5 : vector<1x64xf32> to vector<8x64xf32>
    %92 = arith.addf %90, %91 : vector<8x64xf32>
    %93 = vector.extract_strided_slice %92 {offsets = [0, 32], sizes = [8, 32], strides = [1, 1]} : vector<8x64xf32> to vector<8x32xf32>
    %94 = arith.negf %93 : vector<8x32xf32>
    %95 = math.exp %94 : vector<8x32xf32>
    %cst_52 = arith.constant 1.000000e+00 : f32
    %96 = vector.broadcast %cst_52 : f32 to vector<8x32xf32>
    %97 = arith.addf %96, %95 : vector<8x32xf32>
    %98 = arith.divf %96, %97 : vector<8x32xf32>
    %99 = vector.extract_strided_slice %92 {offsets = [0, 0], sizes = [8, 32], strides = [1, 1]} : vector<8x64xf32> to vector<8x32xf32>
    %100 = arith.mulf %99, %98 : vector<8x32xf32>
    %c1_53 = arith.constant 1 : index
    %c0_54 = arith.constant 0 : index
    %c0_55 = arith.constant 0 : index
    %101 = vector.load %arg9[%c1_53, %c0_54, %c0_55] : memref<2x8x32xf32, #tpu.memory_space<vmem>>, vector<1x8x32xf32>
    %102 = vector.shape_cast %101 : vector<1x8x32xf32> to vector<8x32xf32>
    %103 = vector.shape_cast %100 : vector<8x32xf32> to vector<1x8x32xf32>
    tpu.vector_store %arg9[%c1_53, %c0_54, %c0_55], %103 {strides = array<i32>} : memref<2x8x32xf32, #tpu.memory_space<vmem>>, vector<1x8x32xf32>,
    return
  }
  func.func @transform_0(%arg0: i32) -> (i32, i32, i32) {
    %c0_i32 = arith.constant 0 : i32
    %c0_i32_0 = arith.constant 0 : i32
    %c0_i32_1 = arith.constant 0 : i32
    return %arg0, %c0_i32, %c0_i32_0 : i32, i32, i32
  }
  func.func @transform_1(%arg0: i32) -> (i32, i32, i32) {
    %c0_i32 = arith.constant 0 : i32
    %c0_i32_0 = arith.constant 0 : i32
    %c0_i32_1 = arith.constant 0 : i32
    return %arg0, %c0_i32, %c0_i32_0 : i32, i32, i32
  }
  func.func @transform_2(%arg0: i32) -> (i32, i32, i32) {
    %c0_i32 = arith.constant 0 : i32
    %c0_i32_0 = arith.constant 0 : i32
    %c0_i32_1 = arith.constant 0 : i32
    %c0_i32_2 = arith.constant 0 : i32
    return %c0_i32, %c0_i32_0, %c0_i32_1 : i32, i32, i32
  }
  func.func @transform_3(%arg0: i32) -> (i32, i32, i32) {
    %c0_i32 = arith.constant 0 : i32
    %c0_i32_0 = arith.constant 0 : i32
    %c0_i32_1 = arith.constant 0 : i32
    %c0_i32_2 = arith.constant 0 : i32
    return %c0_i32, %c0_i32_0, %c0_i32_1 : i32, i32, i32
  }
  func.func @transform_4(%arg0: i32) -> (i32, i32, i32) {
    %c0_i32 = arith.constant 0 : i32
    %c0_i32_0 = arith.constant 0 : i32
    %c0_i32_1 = arith.constant 0 : i32
    %c0_i32_2 = arith.constant 0 : i32
    return %c0_i32, %c0_i32_0, %c0_i32_1 : i32, i32, i32
  }
  func.func @transform_5(%arg0: i32) -> (i32, i32, i32) {
    %c0_i32 = arith.constant 0 : i32
    %c0_i32_0 = arith.constant 0 : i32
    %c0_i32_1 = arith.constant 0 : i32
    %c0_i32_2 = arith.constant 0 : i32
    return %c0_i32, %c0_i32_0, %c0_i32_1 : i32, i32, i32
  }
  func.func @transform_6(%arg0: i32) -> (i32, i32, i32) {
    %c0_i32 = arith.constant 0 : i32
    %c0_i32_0 = arith.constant 0 : i32
    %c0_i32_1 = arith.constant 0 : i32
    %c0_i32_2 = arith.constant 0 : i32
    return %c0_i32, %c0_i32_0, %c0_i32_1 : i32, i32, i32
  }
  func.func @transform_7(%arg0: i32) -> (i32, i32) {
    %c0_i32 = arith.constant 0 : i32
    %c0_i32_0 = arith.constant 0 : i32
    %c0_i32_1 = arith.constant 0 : i32
    return %c0_i32, %c0_i32_0 : i32, i32
  }
  func.func @transform_8(%arg0: i32) -> (i32, i32, i32) {
    %c0_i32 = arith.constant 0 : i32
    %c0_i32_0 = arith.constant 0 : i32
    %c0_i32_1 = arith.constant 0 : i32
    return %arg0, %c0_i32, %c0_i32_0 : i32, i32, i32
  }
}

</mosaic_0001>

<llo_original>
// kernel: tpu_custom_call.1
$region0: #{tpu_custom_call.1}
  #allocation0 [shape = 'u32[]', space=smem, size = 0x4, offset = 0x4, fixed_abs, tag = 'smem constant byte address 0x4 - core index']
  #allocation1 [shape = 'u32[72,128]{1,0:T(1,128)}', space=vmem, size = 0x9000, scoped, tag = 'internal scratch']
  %s0 = inlined_call_operand.vmem [shape: f32[2,8,32], index: 0, kind: input, shape index: {}]
  %s1 = inlined_call_operand.vmem [shape: f32[2,8,32], index: 1, kind: input, shape index: {}]
  %s2 = inlined_call_operand.vmem [shape: bf16[4,32,8], index: 2, kind: input, shape index: {}]
  %s3 = inlined_call_operand.vmem [shape: bf16[4,32,8], index: 3, kind: input, shape index: {}]
  %s4 = inlined_call_operand.vmem [shape: bf16[4,32,8], index: 4, kind: input, shape index: {}]
  %s5 = inlined_call_operand.vmem [shape: bf16[4,8,64], index: 5, kind: input, shape index: {}]
  %s6 = inlined_call_operand.vmem [shape: bf16[4,8,64], index: 6, kind: input, shape index: {}]
  %s7 = inlined_call_operand.vmem [shape: f32[1,64], index: 7, kind: input, shape index: {}]
  %s8 = inlined_call_operand.hbm [shape: f32[2,8,32], index: 8, kind: output, shape index: {}]
  %s9 = sld [smem:[#allocation0]]
  $region42: #{tpu_custom_call.1} parent=0
    _
  %s11 = ssub.s32 1, %s9
  %s12 = scalar_select 0, %s11, %s9
  $region1: #{tpu_custom_call.1} parent=0
    #allocation2 [shape = 'u8[8192]{0}', space=vmem, size = 0x2000, scoped, tag = 'output window, operand 0, single buffered']
    #allocation3 [shape = 's32[1]{0}', space=sflag, size = 0x4, scoped, tag = 'scoped memory for tpu_custom_call.1']
    %13 = vsyncpa [#allocation3], 0
    // Predicated region
    $region2: #{tpu_custom_call.1} parent=1 // pred_check
      _
    $region3: #{tpu_custom_call.1} parent=1 // pred_check_branch
      %15 = sbr.rel (0) target = $region5
    $region4: #{tpu_custom_call.1} parent=1 // pred_region
      _
    $region5: #{tpu_custom_call.1} parent=1 // pred_fallthru
      _
    // Predicated region
    $region6: #{tpu_custom_call.1} parent=1 // pred_check
      _
    $region7: #{tpu_custom_call.1} parent=1 // pred_check_branch
      %17 = sbr.rel (0) target = $region9
    $region8: #{tpu_custom_call.1} parent=1 // pred_region
      _
    $region9: #{tpu_custom_call.1} parent=1 // pred_fallthru
      _
    // Predicated region
    $region10: #{tpu_custom_call.1} parent=1 // pred_check
      _
    $region11: #{tpu_custom_call.1} parent=1 // pred_check_branch
      %19 = sbr.rel (0) target = $region13
    $region12: #{tpu_custom_call.1} parent=1 // pred_region
      _
    $region13: #{tpu_custom_call.1} parent=1 // pred_fallthru
      _
    // Predicated region
    $region14: #{tpu_custom_call.1} parent=1 // pred_check
      _
    $region15: #{tpu_custom_call.1} parent=1 // pred_check_branch
      %21 = sbr.rel (0) target = $region17
    $region16: #{tpu_custom_call.1} parent=1 // pred_region
      _
    $region17: #{tpu_custom_call.1} parent=1 // pred_fallthru
      _
    // Predicated region
    $region18: #{tpu_custom_call.1} parent=1 // pred_check
      _
    $region19: #{tpu_custom_call.1} parent=1 // pred_check_branch
      %23 = sbr.rel (0) target = $region21
    $region20: #{tpu_custom_call.1} parent=1 // pred_region
      _
    $region21: #{tpu_custom_call.1} parent=1 // pred_fallthru
      _
    // Predicated region
    $region22: #{tpu_custom_call.1} parent=1 // pred_check
      _
    $region23: #{tpu_custom_call.1} parent=1 // pred_check_branch
      %25 = sbr.rel (0) target = $region25
    $region24: #{tpu_custom_call.1} parent=1 // pred_region
      _
    $region25: #{tpu_custom_call.1} parent=1 // pred_fallthru
      _
    // Predicated region
    $region26: #{tpu_custom_call.1} parent=1 // pred_check
      _
    $region27: #{tpu_custom_call.1} parent=1 // pred_check_branch
      %27 = sbr.rel (0) target = $region29
    $region28: #{tpu_custom_call.1} parent=1 // pred_region
      _
    $region29: #{tpu_custom_call.1} parent=1 // pred_fallthru
      _
    // Predicated region
    $region30: #{tpu_custom_call.1} parent=1 // pred_check
      _
    $region31: #{tpu_custom_call.1} parent=1 // pred_check_branch
      %29 = sbr.rel (0) target = $region33
    $region32: #{tpu_custom_call.1} parent=1 // pred_region
      _
    $region33: #{tpu_custom_call.1} parent=1 // pred_fallthru
      _
    %v31 = vld [vmem:[%s2] sm:$0xf]
    %v32 = vld [vmem:[%s2 + $0x4] sm:$0xf]
    %v33 = vld [vmem:[%s2 + $0x8] sm:$0xf]
    %v34 = vld [vmem:[%s2 + $0xc] sm:$0xf]
    %v35 = vld [vmem:[%s2 + $0x10] sm:$0xf]
    %v36 = vld [vmem:[%s2 + $0x14] sm:$0xf]
    %v37 = vld [vmem:[%s2 + $0x18] sm:$0xf]
    %v38 = vld [vmem:[%s2 + $0x1c] sm:$0xf]
    %v39 = vld [vmem:[%s2 + $0x20] sm:$0xf]
    %v40 = vld [vmem:[%s2 + $0x24] sm:$0xf]
    %v41 = vld [vmem:[%s2 + $0x28] sm:$0xf]
    %v42 = vld [vmem:[%s2 + $0x2c] sm:$0xf]
    %v43 = vld [vmem:[%s2 + $0x30] sm:$0xf]
    %v44 = vld [vmem:[%s2 + $0x34] sm:$0xf]
    %v45 = vld [vmem:[%s2 + $0x38] sm:$0xf]
    %v46 = vld [vmem:[%s2 + $0x3c] sm:$0xf]
    %v47 = vld [vmem:[%s3] sm:$0xf]
    %v48 = vld [vmem:[%s3 + $0x4] sm:$0xf]
    %v49 = vld [vmem:[%s3 + $0x8] sm:$0xf]
    %v50 = vld [vmem:[%s3 + $0xc] sm:$0xf]
    %v51 = vld [vmem:[%s3 + $0x10] sm:$0xf]
    %v52 = vld [vmem:[%s3 + $0x14] sm:$0xf]
    %v53 = vld [vmem:[%s3 + $0x18] sm:$0xf]
    %v54 = vld [vmem:[%s3 + $0x1c] sm:$0xf]
    %v55 = vld [vmem:[%s3 + $0x20] sm:$0xf]
    %v56 = vld [vmem:[%s3 + $0x24] sm:$0xf]
    %v57 = vld [vmem:[%s3 + $0x28] sm:$0xf]
    %v58 = vld [vmem:[%s3 + $0x2c] sm:$0xf]
    %v59 = vld [vmem:[%s3 + $0x30] sm:$0xf]
    %v60 = vld [vmem:[%s3 + $0x34] sm:$0xf]
    %v61 = vld [vmem:[%s3 + $0x38] sm:$0xf]
    %v62 = vld [vmem:[%s3 + $0x3c] sm:$0xf]
    %v63 = vld [vmem:[%s4] sm:$0xf]
    %v64 = vld [vmem:[%s4 + $0x4] sm:$0xf]
    %v65 = vld [vmem:[%s4 + $0x8] sm:$0xf]
    %v66 = vld [vmem:[%s4 + $0xc] sm:$0xf]
    %v67 = vld [vmem:[%s4 + $0x10] sm:$0xf]
    %v68 = vld [vmem:[%s4 + $0x14] sm:$0xf]
    %v69 = vld [vmem:[%s4 + $0x18] sm:$0xf]
    %v70 = vld [vmem:[%s4 + $0x1c] sm:$0xf]
    %v71 = vld [vmem:[%s4 + $0x20] sm:$0xf]
    %v72 = vld [vmem:[%s4 + $0x24] sm:$0xf]
    %v73 = vld [vmem:[%s4 + $0x28] sm:$0xf]
    %v74 = vld [vmem:[%s4 + $0x2c] sm:$0xf]
    %v75 = vld [vmem:[%s4 + $0x30] sm:$0xf]
    %v76 = vld [vmem:[%s4 + $0x34] sm:$0xf]
    %v77 = vld [vmem:[%s4 + $0x38] sm:$0xf]
    %v78 = vld [vmem:[%s4 + $0x3c] sm:$0xf]
    %v79 = vld [vmem:[%s5] sm:$0xf]
    %v80 = vld [vmem:[%s5 + $0x4] sm:$0xf]
    %v81 = vld [vmem:[%s5 + $0x8] sm:$0xf]
    %v82 = vld [vmem:[%s5 + $0xc] sm:$0xf]
    %v83 = vld [vmem:[%s6] sm:$0xf]
    %v84 = vld [vmem:[%s6 + $0x4] sm:$0xf]
    %v85 = vld [vmem:[%s6 + $0x8] sm:$0xf]
    %v86 = vld [vmem:[%s6 + $0xc] sm:$0xf]
    %v87 = vld [vmem:[%s7] sm:$0x1]
    %v88 = vld [vmem:[%s0] sm:$0xff]
    %v89 = vpack.c.bf16 %v88, %v88
    %v90 = vld [vmem:[%s1] sm:$0xff]
    %v91 = vpack.c.bf16 %v90, %v90
    %v96 = vunpack.c.l.b16 %v31
    %v97 = vunpack.c.l.b16 %v32
    %v98 = vunpack.c.l.b16 %v33
    %v99 = vunpack.c.l.b16 %v34
    %v100 = vpack.c.b16 %v97, %v96
    %v101 = vpack.c.b16 %v99, %v98
    %vm104 = vcmask 261120
    %v106 = vsel %vm104, %v89, 0
    %108 = vmatpush.bf16.msra.mxu0 0
    %109 = vmatpush.bf16.msra.mxu0 0
    %110 = vmatpush.bf16.msra.mxu0 0
    %111 = vmatpush.bf16.msra.mxu0 0
    %112 = vmatpush.bf16.msra.mxu0 0
    %113 = vmatpush.bf16.msra.mxu0 0
    %114 = vmatpush.bf16.msra.mxu0 %v101
    %115 = vmatpush.bf16.msra.mxu0 %v100
    %116 = vmatmul.bf16.gmra.mxu0 %v106
    %v117 = vpop.f32.mrf.mxu0
    %v118 = vadd.f32 0.0, %v117
    %v119 = vpop.f32.mrf.mxu0
    %120 = vdwg.mxu0
    %v125 = vunpack.c.l.b16 %v35
    %v126 = vunpack.c.l.b16 %v36
    %v127 = vunpack.c.l.b16 %v37
    %v128 = vunpack.c.l.b16 %v38
    %v129 = vpack.c.b16 %v126, %v125
    %v130 = vpack.c.b16 %v128, %v127
    %133 = vmatpush.bf16.msra.mxu0 0
    %134 = vmatpush.bf16.msra.mxu0 0
    %135 = vmatpush.bf16.msra.mxu0 0
    %136 = vmatpush.bf16.msra.mxu0 0
    %137 = vmatpush.bf16.msra.mxu0 0
    %138 = vmatpush.bf16.msra.mxu0 0
    %139 = vmatpush.bf16.msra.mxu0 %v130
    %140 = vmatpush.bf16.msra.mxu0 %v129
    %141 = vmatmul.bf16.gmra.mxu0 %v106
    %v142 = vpop.f32.mrf.mxu0
    %v143 = vadd.f32 0.0, %v142
    %v144 = vpop.f32.mrf.mxu0
    %145 = vdwg.mxu0
    %v150 = vunpack.c.l.b16 %v39
    %v151 = vunpack.c.l.b16 %v40
    %v152 = vunpack.c.l.b16 %v41
    %v153 = vunpack.c.l.b16 %v42
    %v154 = vpack.c.b16 %v151, %v150
    %v155 = vpack.c.b16 %v153, %v152
    %158 = vmatpush.bf16.msra.mxu0 0
    %159 = vmatpush.bf16.msra.mxu0 0
    %160 = vmatpush.bf16.msra.mxu0 0
    %161 = vmatpush.bf16.msra.mxu0 0
    %162 = vmatpush.bf16.msra.mxu0 0
    %163 = vmatpush.bf16.msra.mxu0 0
    %164 = vmatpush.bf16.msra.mxu0 %v155
    %165 = vmatpush.bf16.msra.mxu0 %v154
    %166 = vmatmul.bf16.gmra.mxu0 %v106
    %v167 = vpop.f32.mrf.mxu0
    %v168 = vadd.f32 0.0, %v167
    %v169 = vpop.f32.mrf.mxu0
    %170 = vdwg.mxu0
    %v175 = vunpack.c.l.b16 %v43
    %v176 = vunpack.c.l.b16 %v44
    %v177 = vunpack.c.l.b16 %v45
    %v178 = vunpack.c.l.b16 %v46
    %v179 = vpack.c.b16 %v176, %v175
    %v180 = vpack.c.b16 %v178, %v177
    %183 = vmatpush.bf16.msra.mxu0 0
    %184 = vmatpush.bf16.msra.mxu0 0
    %185 = vmatpush.bf16.msra.mxu0 0
    %186 = vmatpush.bf16.msra.mxu0 0
    %187 = vmatpush.bf16.msra.mxu0 0
    %188 = vmatpush.bf16.msra.mxu0 0
    %189 = vmatpush.bf16.msra.mxu0 %v180
    %190 = vmatpush.bf16.msra.mxu0 %v179
    %191 = vmatmul.bf16.gmra.mxu0 %v106
    %v192 = vpop.f32.mrf.mxu0
    %v193 = vadd.f32 0.0, %v192
    %v194 = vpop.f32.mrf.mxu0
    %195 = vdwg.mxu0
    %v200 = vunpack.c.l.b16 %v47
    %v201 = vunpack.c.l.b16 %v48
    %v202 = vunpack.c.l.b16 %v49
    %v203 = vunpack.c.l.b16 %v50
    %v204 = vpack.c.b16 %v201, %v200
    %v205 = vpack.c.b16 %v203, %v202
    %v209 = vsel %vm104, %v91, 0
    %211 = vmatpush.bf16.msra.mxu0 0
    %212 = vmatpush.bf16.msra.mxu0 0
    %213 = vmatpush.bf16.msra.mxu0 0
    %214 = vmatpush.bf16.msra.mxu0 0
    %215 = vmatpush.bf16.msra.mxu0 0
    %216 = vmatpush.bf16.msra.mxu0 0
    %217 = vmatpush.bf16.msra.mxu0 %v205
    %218 = vmatpush.bf16.msra.mxu0 %v204
    %219 = vmatmul.bf16.gmra.mxu0 %v209
    %v220 = vpop.f32.mrf.mxu0
    %v221 = vadd.f32 0.0, %v220
    %v222 = vpop.f32.mrf.mxu0
    %223 = vdwg.mxu0
    %v228 = vunpack.c.l.b16 %v51
    %v229 = vunpack.c.l.b16 %v52
    %v230 = vunpack.c.l.b16 %v53
    %v231 = vunpack.c.l.b16 %v54
    %v232 = vpack.c.b16 %v229, %v228
    %v233 = vpack.c.b16 %v231, %v230
    %236 = vmatpush.bf16.msra.mxu0 0
    %237 = vmatpush.bf16.msra.mxu0 0
    %238 = vmatpush.bf16.msra.mxu0 0
    %239 = vmatpush.bf16.msra.mxu0 0
    %240 = vmatpush.bf16.msra.mxu0 0
    %241 = vmatpush.bf16.msra.mxu0 0
    %242 = vmatpush.bf16.msra.mxu0 %v233
    %243 = vmatpush.bf16.msra.mxu0 %v232
    %244 = vmatmul.bf16.gmra.mxu0 %v209
    %v245 = vpop.f32.mrf.mxu0
    %v246 = vadd.f32 0.0, %v245
    %v247 = vpop.f32.mrf.mxu0
    %248 = vdwg.mxu0
    %v253 = vunpack.c.l.b16 %v55
    %v254 = vunpack.c.l.b16 %v56
    %v255 = vunpack.c.l.b16 %v57
    %v256 = vunpack.c.l.b16 %v58
    %v257 = vpack.c.b16 %v254, %v253
    %v258 = vpack.c.b16 %v256, %v255
    %261 = vmatpush.bf16.msra.mxu0 0
    %262 = vmatpush.bf16.msra.mxu0 0
    %263 = vmatpush.bf16.msra.mxu0 0
    %264 = vmatpush.bf16.msra.mxu0 0
    %265 = vmatpush.bf16.msra.mxu0 0
    %266 = vmatpush.bf16.msra.mxu0 0
    %267 = vmatpush.bf16.msra.mxu0 %v258
    %268 = vmatpush.bf16.msra.mxu0 %v257
    %269 = vmatmul.bf16.gmra.mxu0 %v209
    %v270 = vpop.f32.mrf.mxu0
    %v271 = vadd.f32 0.0, %v270
    %v272 = vpop.f32.mrf.mxu0
    %273 = vdwg.mxu0
    %v278 = vunpack.c.l.b16 %v59
    %v279 = vunpack.c.l.b16 %v60
    %v280 = vunpack.c.l.b16 %v61
    %v281 = vunpack.c.l.b16 %v62
    %v282 = vpack.c.b16 %v279, %v278
    %v283 = vpack.c.b16 %v281, %v280
    %286 = vmatpush.bf16.msra.mxu0 0
    %287 = vmatpush.bf16.msra.mxu0 0
    %288 = vmatpush.bf16.msra.mxu0 0
    %289 = vmatpush.bf16.msra.mxu0 0
    %290 = vmatpush.bf16.msra.mxu0 0
    %291 = vmatpush.bf16.msra.mxu0 0
    %292 = vmatpush.bf16.msra.mxu0 %v283
    %293 = vmatpush.bf16.msra.mxu0 %v282
    %294 = vmatmul.bf16.gmra.mxu0 %v209
    %v295 = vpop.f32.mrf.mxu0
    %v296 = vadd.f32 0.0, %v295
    %v297 = vpop.f32.mrf.mxu0
    %298 = vdwg.mxu0
    %v303 = vunpack.c.l.b16 %v63
    %v304 = vunpack.c.l.b16 %v64
    %v305 = vunpack.c.l.b16 %v65
    %v306 = vunpack.c.l.b16 %v66
    %v307 = vpack.c.b16 %v304, %v303
    %v308 = vpack.c.b16 %v306, %v305
    %311 = vmatpush.bf16.msra.mxu0 0
    %312 = vmatpush.bf16.msra.mxu0 0
    %313 = vmatpush.bf16.msra.mxu0 0
    %314 = vmatpush.bf16.msra.mxu0 0
    %315 = vmatpush.bf16.msra.mxu0 0
    %316 = vmatpush.bf16.msra.mxu0 0
    %317 = vmatpush.bf16.msra.mxu0 %v308
    %318 = vmatpush.bf16.msra.mxu0 %v307
    %319 = vmatmul.bf16.gmra.mxu0 %v209
    %v320 = vpop.f32.mrf.mxu0
    %v321 = vadd.f32 0.0, %v320
    %v322 = vpop.f32.mrf.mxu0
    %323 = vdwg.mxu0
    %v328 = vunpack.c.l.b16 %v67
    %v329 = vunpack.c.l.b16 %v68
    %v330 = vunpack.c.l.b16 %v69
    %v331 = vunpack.c.l.b16 %v70
    %v332 = vpack.c.b16 %v329, %v328
    %v333 = vpack.c.b16 %v331, %v330
    %336 = vmatpush.bf16.msra.mxu0 0
    %337 = vmatpush.bf16.msra.mxu0 0
    %338 = vmatpush.bf16.msra.mxu0 0
    %339 = vmatpush.bf16.msra.mxu0 0
    %340 = vmatpush.bf16.msra.mxu0 0
    %341 = vmatpush.bf16.msra.mxu0 0
    %342 = vmatpush.bf16.msra.mxu0 %v333
    %343 = vmatpush.bf16.msra.mxu0 %v332
    %344 = vmatmul.bf16.gmra.mxu0 %v209
    %v345 = vpop.f32.mrf.mxu0
    %v346 = vadd.f32 0.0, %v345
    %v347 = vpop.f32.mrf.mxu0
    %348 = vdwg.mxu0
    %v353 = vunpack.c.l.b16 %v71
    %v354 = vunpack.c.l.b16 %v72
    %v355 = vunpack.c.l.b16 %v73
    %v356 = vunpack.c.l.b16 %v74
    %v357 = vpack.c.b16 %v354, %v353
    %v358 = vpack.c.b16 %v356, %v355
    %361 = vmatpush.bf16.msra.mxu0 0
    %362 = vmatpush.bf16.msra.mxu0 0
    %363 = vmatpush.bf16.msra.mxu0 0
    %364 = vmatpush.bf16.msra.mxu0 0
    %365 = vmatpush.bf16.msra.mxu0 0
    %366 = vmatpush.bf16.msra.mxu0 0
    %367 = vmatpush.bf16.msra.mxu0 %v358
    %368 = vmatpush.bf16.msra.mxu0 %v357
    %369 = vmatmul.bf16.gmra.mxu0 %v209
    %v370 = vpop.f32.mrf.mxu0
    %v371 = vadd.f32 0.0, %v370
    %v372 = vpop.f32.mrf.mxu0
    %373 = vdwg.mxu0
    %v378 = vunpack.c.l.b16 %v75
    %v379 = vunpack.c.l.b16 %v76
    %v380 = vunpack.c.l.b16 %v77
    %v381 = vunpack.c.l.b16 %v78
    %v382 = vpack.c.b16 %v379, %v378
    %v383 = vpack.c.b16 %v381, %v380
    %386 = vmatpush.bf16.msra.mxu0 0
    %387 = vmatpush.bf16.msra.mxu0 0
    %388 = vmatpush.bf16.msra.mxu0 0
    %389 = vmatpush.bf16.msra.mxu0 0
    %390 = vmatpush.bf16.msra.mxu0 0
    %391 = vmatpush.bf16.msra.mxu0 0
    %392 = vmatpush.bf16.msra.mxu0 %v383
    %393 = vmatpush.bf16.msra.mxu0 %v382
    %394 = vmatmul.bf16.gmra.mxu0 %v209
    %v395 = vpop.f32.mrf.mxu0
    %v396 = vadd.f32 0.0, %v395
    %v397 = vpop.f32.mrf.mxu0
    %398 = vdwg.mxu0
    %v399 = vpack.c.bf16 %v118, %v118
    %v400 = vpack.c.bf16 %v143, %v143
    %v401 = vpack.c.bf16 %v168, %v168
    %v402 = vpack.c.bf16 %v193, %v193
    %v403 = vpack.c.bf16 %v221, %v221
    %v404 = vpack.c.bf16 %v246, %v246
    %v405 = vpack.c.bf16 %v271, %v271
    %v406 = vpack.c.bf16 %v296, %v296
    %vm407 = vcmask 64512
    %v409 = vsel %vm407, %v399, 0
    %v412 = vsel %vm407, %v403, 0
    %414 = vmatpush.bf16.xpose.msra.mxu0 0
    %415 = vmatpush.bf16.xpose.msra.mxu0 0
    %416 = vmatpush.bf16.xpose.msra.mxu0 0
    %417 = vmatpush.bf16.xpose.msra.mxu0 0
    %418 = vmatpush.bf16.xpose.msra.mxu0 0
    %419 = vmatpush.bf16.xpose.msra.mxu0 0
    %420 = vmatpush.bf16.xpose.msra.mxu0 0
    %421 = vmatpush.bf16.xpose.msra.mxu0 %v412
    %422 = vmatmul.bf16.gmra.mxu0 %v409
    %v423 = vpop.f32.mrf.mxu0
    %v424 = vadd.f32 0.0, %v423
    %v425 = vpop.f32.mrf.mxu0
    %426 = vdwg.mxu0
    %v428 = vsel %vm407, %v400, 0
    %v431 = vsel %vm407, %v404, 0
    %433 = vmatpush.bf16.xpose.msra.mxu0 0
    %434 = vmatpush.bf16.xpose.msra.mxu0 0
    %435 = vmatpush.bf16.xpose.msra.mxu0 0
    %436 = vmatpush.bf16.xpose.msra.mxu0 0
    %437 = vmatpush.bf16.xpose.msra.mxu0 0
    %438 = vmatpush.bf16.xpose.msra.mxu0 0
    %439 = vmatpush.bf16.xpose.msra.mxu0 0
    %440 = vmatpush.bf16.xpose.msra.mxu0 %v431
    %441 = vmatmul.bf16.gmra.mxu0 %v428
    %v442 = vpop.f32.mrf.mxu0
    %v443 = vadd.f32 0.0, %v442
    %v444 = vpop.f32.mrf.mxu0
    %445 = vdwg.mxu0
    %v447 = vsel %vm407, %v401, 0
    %v450 = vsel %vm407, %v405, 0
    %452 = vmatpush.bf16.xpose.msra.mxu0 0
    %453 = vmatpush.bf16.xpose.msra.mxu0 0
    %454 = vmatpush.bf16.xpose.msra.mxu0 0
    %455 = vmatpush.bf16.xpose.msra.mxu0 0
    %456 = vmatpush.bf16.xpose.msra.mxu0 0
    %457 = vmatpush.bf16.xpose.msra.mxu0 0
    %458 = vmatpush.bf16.xpose.msra.mxu0 0
    %459 = vmatpush.bf16.xpose.msra.mxu0 %v450
    %460 = vmatmul.bf16.gmra.mxu0 %v447
    %v461 = vpop.f32.mrf.mxu0
    %v462 = vadd.f32 0.0, %v461
    %v463 = vpop.f32.mrf.mxu0
    %464 = vdwg.mxu0
    %v466 = vsel %vm407, %v402, 0
    %v469 = vsel %vm407, %v406, 0
    %471 = vmatpush.bf16.xpose.msra.mxu0 0
    %472 = vmatpush.bf16.xpose.msra.mxu0 0
    %473 = vmatpush.bf16.xpose.msra.mxu0 0
    %474 = vmatpush.bf16.xpose.msra.mxu0 0
    %475 = vmatpush.bf16.xpose.msra.mxu0 0
    %476 = vmatpush.bf16.xpose.msra.mxu0 0
    %477 = vmatpush.bf16.xpose.msra.mxu0 0
    %478 = vmatpush.bf16.xpose.msra.mxu0 %v469
    %479 = vmatmul.bf16.gmra.mxu0 %v466
    %v480 = vpop.f32.mrf.mxu0
    %v481 = vadd.f32 0.0, %v480
    %v482 = vpop.f32.mrf.mxu0
    %483 = vdwg.mxu0
    %v484 = vmul.f32 %v424, 0.35355338
    %v485 = vmul.f32 %v443, 0.35355338
    %v486 = vmul.f32 %v462, 0.35355338
    %v487 = vmul.f32 %v481, 0.35355338
    %v488 = vsel %vm407, %v484, -inf
    %489 = vmax.xlane.f32.xlu0 %v488
    %v490 = vpop.xlane.xlu0 %489
    %v491 = vsel %vm407, %v485, -inf
    %492 = vmax.xlane.f32.xlu0 %v491
    %v493 = vpop.xlane.xlu0 %492
    %v494 = vsel %vm407, %v486, -inf
    %495 = vmax.xlane.f32.xlu0 %v494
    %v496 = vpop.xlane.xlu0 %495
    %v497 = vsel %vm407, %v487, -inf
    %498 = vmax.xlane.f32.xlu0 %v497
    %v499 = vpop.xlane.xlu0 %498
    %v500 = vsub.f32 %v484, %v490
    %v501 = vsub.f32 %v485, %v493
    %v502 = vsub.f32 %v486, %v496
    %v503 = vsub.f32 %v487, %v499
    %v504 = vmul.f32 %v500, 1.442695
    %v505 = vpow.pop %v504
    %v506 = vmul.f32 %v501, 1.442695
    %v507 = vpow.pop %v506
    %v508 = vmul.f32 %v502, 1.442695
    %v509 = vpow.pop %v508
    %v510 = vmul.f32 %v503, 1.442695
    %v511 = vpow.pop %v510
    %v512 = vsel %vm407, %v505, 0.0
    %513 = vadd.xlane.f32.xlu0 %v512
    %v514 = vpop.xlane.xlu0 %513
    %v515 = vsel %vm407, %v507, 0.0
    %516 = vadd.xlane.f32.xlu0 %v515
    %v517 = vpop.xlane.xlu0 %516
    %v518 = vsel %vm407, %v509, 0.0
    %519 = vadd.xlane.f32.xlu0 %v518
    %v520 = vpop.xlane.xlu0 %519
    %v521 = vsel %vm407, %v511, 0.0
    %522 = vadd.xlane.f32.xlu0 %v521
    %v523 = vpop.xlane.xlu0 %522
    %v524 = vrcp.pop %v514
    %v525 = vmul.f32 %v514, %v524
    %v526 = vsub.f32 1.0, %v525
    %v527 = vmul.f32 %v524, %v526
    %v528 = vadd.f32 %v524, %v527
    %vm529 = vweird.f32 %v514
    %vm530 = vweird.f32 %v524
    %vm531 = vmor %vm529, %vm530
    %v532 = vsel %vm531, %v524, %v528
    %v533 = vand.u32 2147483647, %v514
    %vm534 = vcmp.eq.f32.partialorder %v533, 8.507059e+37
    %v535 = vand.u32 %v514, 2147483648
    %v536 = vor.u32 1.1754944e-38, %v535
    %v537 = vsel %vm534, %v536, %v532
    %v538 = vrcp.pop %v517
    %v539 = vmul.f32 %v517, %v538
    %v540 = vsub.f32 1.0, %v539
    %v541 = vmul.f32 %v538, %v540
    %v542 = vadd.f32 %v538, %v541
    %vm543 = vweird.f32 %v517
    %vm544 = vweird.f32 %v538
    %vm545 = vmor %vm543, %vm544
    %v546 = vsel %vm545, %v538, %v542
    %v547 = vand.u32 2147483647, %v517
    %vm548 = vcmp.eq.f32.partialorder %v547, 8.507059e+37
    %v549 = vand.u32 %v517, 2147483648
    %v550 = vor.u32 1.1754944e-38, %v549
    %v551 = vsel %vm548, %v550, %v546
    %v552 = vrcp.pop %v520
    %v553 = vmul.f32 %v520, %v552
    %v554 = vsub.f32 1.0, %v553
    %v555 = vmul.f32 %v552, %v554
    %v556 = vadd.f32 %v552, %v555
    %vm557 = vweird.f32 %v520
    %vm558 = vweird.f32 %v552
    %vm559 = vmor %vm557, %vm558
    %v560 = vsel %vm559, %v552, %v556
    %v561 = vand.u32 2147483647, %v520
    %vm562 = vcmp.eq.f32.partialorder %v561, 8.507059e+37
    %v563 = vand.u32 %v520, 2147483648
    %v564 = vor.u32 1.1754944e-38, %v563
    %v565 = vsel %vm562, %v564, %v560
    %v566 = vrcp.pop %v523
    %v567 = vmul.f32 %v523, %v566
    %v568 = vsub.f32 1.0, %v567
    %v569 = vmul.f32 %v566, %v568
    %v570 = vadd.f32 %v566, %v569
    %vm571 = vweird.f32 %v523
    %vm572 = vweird.f32 %v566
    %vm573 = vmor %vm571, %vm572
    %v574 = vsel %vm573, %v566, %v570
    %v575 = vand.u32 2147483647, %v523
    %vm576 = vcmp.eq.f32.partialorder %v575, 8.507059e+37
    %v577 = vand.u32 %v523, 2147483648
    %v578 = vor.u32 1.1754944e-38, %v577
    %v579 = vsel %vm576, %v578, %v574
    %v580 = vmul.f32 %v505, %v537
    %v581 = vmul.f32 %v507, %v551
    %v582 = vmul.f32 %v509, %v565
    %v583 = vmul.f32 %v511, %v579
    %v584 = vpack.c.bf16 %v580, %v580
    %v585 = vpack.c.bf16 %v581, %v581
    %v586 = vpack.c.bf16 %v582, %v582
    %v587 = vpack.c.bf16 %v583, %v583
    %v588 = vpack.c.bf16 %v321, %v321
    %v589 = vpack.c.bf16 %v346, %v346
    %v590 = vpack.c.bf16 %v371, %v371
    %v591 = vpack.c.bf16 %v396, %v396
    %v593 = vsel %vm407, %v584, 0
    %vm595 = vcmask 1043456
    %v597 = vsel %vm595, %v588, 0
    %599 = vmatpush.bf16.msra.mxu0 0
    %600 = vmatpush.bf16.msra.mxu0 0
    %601 = vmatpush.bf16.msra.mxu0 0
    %602 = vmatpush.bf16.msra.mxu0 0
    %603 = vmatpush.bf16.msra.mxu0 0
    %604 = vmatpush.bf16.msra.mxu0 0
    %605 = vmatpush.bf16.msra.mxu0 0
    %606 = vmatpush.bf16.msra.mxu0 %v597
    %607 = vmatmul.bf16.gmra.mxu0 %v593
    %v608 = vpop.f32.mrf.mxu0
    %v609 = vadd.f32 0.0, %v608
    %v610 = vpop.f32.mrf.mxu0
    %611 = vdwg.mxu0
    %v613 = vsel %vm407, %v585, 0
    %v616 = vsel %vm595, %v589, 0
    %618 = vmatpush.bf16.msra.mxu0 0
    %619 = vmatpush.bf16.msra.mxu0 0
    %620 = vmatpush.bf16.msra.mxu0 0
    %621 = vmatpush.bf16.msra.mxu0 0
    %622 = vmatpush.bf16.msra.mxu0 0
    %623 = vmatpush.bf16.msra.mxu0 0
    %624 = vmatpush.bf16.msra.mxu0 0
    %625 = vmatpush.bf16.msra.mxu0 %v616
    %626 = vmatmul.bf16.gmra.mxu0 %v613
    %v627 = vpop.f32.mrf.mxu0
    %v628 = vadd.f32 0.0, %v627
    %v629 = vpop.f32.mrf.mxu0
    %630 = vdwg.mxu0
    %v632 = vsel %vm407, %v586, 0
    %v635 = vsel %vm595, %v590, 0
    %637 = vmatpush.bf16.msra.mxu0 0
    %638 = vmatpush.bf16.msra.mxu0 0
    %639 = vmatpush.bf16.msra.mxu0 0
    %640 = vmatpush.bf16.msra.mxu0 0
    %641 = vmatpush.bf16.msra.mxu0 0
    %642 = vmatpush.bf16.msra.mxu0 0
    %643 = vmatpush.bf16.msra.mxu0 0
    %644 = vmatpush.bf16.msra.mxu0 %v635
    %645 = vmatmul.bf16.gmra.mxu0 %v632
    %v646 = vpop.f32.mrf.mxu0
    %v647 = vadd.f32 0.0, %v646
    %v648 = vpop.f32.mrf.mxu0
    %649 = vdwg.mxu0
    %v651 = vsel %vm407, %v587, 0
    %v654 = vsel %vm595, %v591, 0
    %656 = vmatpush.bf16.msra.mxu0 0
    %657 = vmatpush.bf16.msra.mxu0 0
    %658 = vmatpush.bf16.msra.mxu0 0
    %659 = vmatpush.bf16.msra.mxu0 0
    %660 = vmatpush.bf16.msra.mxu0 0
    %661 = vmatpush.bf16.msra.mxu0 0
    %662 = vmatpush.bf16.msra.mxu0 0
    %663 = vmatpush.bf16.msra.mxu0 %v654
    %664 = vmatmul.bf16.gmra.mxu0 %v651
    %v665 = vpop.f32.mrf.mxu0
    %v666 = vadd.f32 0.0, %v665
    %v667 = vpop.f32.mrf.mxu0
    %668 = vdwg.mxu0
    %v669 = vpack.c.bf16 %v609, %v609
    %v670 = vpack.c.bf16 %v628, %v628
    %v671 = vpack.c.bf16 %v647, %v647
    %v672 = vpack.c.bf16 %v666, %v666
    %v674 = vsel %vm595, %v83, 0
    %676 = vmatpush.bf16.msra.mxu0 0
    %677 = vmatpush.bf16.msra.mxu0 0
    %678 = vmatpush.bf16.msra.mxu0 0
    %679 = vmatpush.bf16.msra.mxu0 0
    %680 = vmatpush.bf16.msra.mxu0 0
    %681 = vmatpush.bf16.msra.mxu0 0
    %682 = vmatpush.bf16.msra.mxu0 0
    %683 = vmatpush.bf16.msra.mxu0 %v674
    %684 = vmatmul.bf16.gmra.mxu0 %v409
    %v685 = vpop.f32.mrf.mxu0
    %v686 = vadd.f32 0.0, %v685
    %v687 = vpop.f32.mrf.mxu0
    %688 = vdwg.mxu0
    %v690 = vsel %vm595, %v84, 0
    %692 = vmatpush.bf16.msra.mxu0 0
    %693 = vmatpush.bf16.msra.mxu0 0
    %694 = vmatpush.bf16.msra.mxu0 0
    %695 = vmatpush.bf16.msra.mxu0 0
    %696 = vmatpush.bf16.msra.mxu0 0
    %697 = vmatpush.bf16.msra.mxu0 0
    %698 = vmatpush.bf16.msra.mxu0 0
    %699 = vmatpush.bf16.msra.mxu0 %v690
    %700 = vmatmul.bf16.gmra.mxu0 %v428
    %v701 = vpop.f32.mrf.mxu0
    %v702 = vadd.f32 0.0, %v701
    %v703 = vpop.f32.mrf.mxu0
    %704 = vdwg.mxu0
    %v706 = vsel %vm595, %v85, 0
    %708 = vmatpush.bf16.msra.mxu0 0
    %709 = vmatpush.bf16.msra.mxu0 0
    %710 = vmatpush.bf16.msra.mxu0 0
    %711 = vmatpush.bf16.msra.mxu0 0
    %712 = vmatpush.bf16.msra.mxu0 0
    %713 = vmatpush.bf16.msra.mxu0 0
    %714 = vmatpush.bf16.msra.mxu0 0
    %715 = vmatpush.bf16.msra.mxu0 %v706
    %716 = vmatmul.bf16.gmra.mxu0 %v447
    %v717 = vpop.f32.mrf.mxu0
    %v718 = vadd.f32 0.0, %v717
    %v719 = vpop.f32.mrf.mxu0
    %720 = vdwg.mxu0
    %v722 = vsel %vm595, %v86, 0
    %724 = vmatpush.bf16.msra.mxu0 0
    %725 = vmatpush.bf16.msra.mxu0 0
    %726 = vmatpush.bf16.msra.mxu0 0
    %727 = vmatpush.bf16.msra.mxu0 0
    %728 = vmatpush.bf16.msra.mxu0 0
    %729 = vmatpush.bf16.msra.mxu0 0
    %730 = vmatpush.bf16.msra.mxu0 0
    %731 = vmatpush.bf16.msra.mxu0 %v722
    %732 = vmatmul.bf16.gmra.mxu0 %v466
    %v733 = vpop.f32.mrf.mxu0
    %v734 = vadd.f32 0.0, %v733
    %v735 = vpop.f32.mrf.mxu0
    %736 = vdwg.mxu0
    %v738 = vsel %vm407, %v669, 0
    %v741 = vsel %vm595, %v79, 0
    %743 = vmatpush.bf16.msra.mxu0 0
    %744 = vmatpush.bf16.msra.mxu0 0
    %745 = vmatpush.bf16.msra.mxu0 0
    %746 = vmatpush.bf16.msra.mxu0 0
    %747 = vmatpush.bf16.msra.mxu0 0
    %748 = vmatpush.bf16.msra.mxu0 0
    %749 = vmatpush.bf16.msra.mxu0 0
    %750 = vmatpush.bf16.msra.mxu0 %v741
    %751 = vmatmul.bf16.gmra.mxu0 %v738
    %v752 = vpop.f32.mrf.mxu0
    %v753 = vadd.f32 %v686, %v752
    %v754 = vpop.f32.mrf.mxu0
    %755 = vdwg.mxu0
    %v757 = vsel %vm407, %v670, 0
    %v760 = vsel %vm595, %v80, 0
    %762 = vmatpush.bf16.msra.mxu0 0
    %763 = vmatpush.bf16.msra.mxu0 0
    %764 = vmatpush.bf16.msra.mxu0 0
    %765 = vmatpush.bf16.msra.mxu0 0
    %766 = vmatpush.bf16.msra.mxu0 0
    %767 = vmatpush.bf16.msra.mxu0 0
    %768 = vmatpush.bf16.msra.mxu0 0
    %769 = vmatpush.bf16.msra.mxu0 %v760
    %770 = vmatmul.bf16.gmra.mxu0 %v757
    %v771 = vpop.f32.mrf.mxu0
    %v772 = vadd.f32 %v702, %v771
    %v773 = vpop.f32.mrf.mxu0
    %774 = vdwg.mxu0
    %v776 = vsel %vm407, %v671, 0
    %v779 = vsel %vm595, %v81, 0
    %781 = vmatpush.bf16.msra.mxu0 0
    %782 = vmatpush.bf16.msra.mxu0 0
    %783 = vmatpush.bf16.msra.mxu0 0
    %784 = vmatpush.bf16.msra.mxu0 0
    %785 = vmatpush.bf16.msra.mxu0 0
    %786 = vmatpush.bf16.msra.mxu0 0
    %787 = vmatpush.bf16.msra.mxu0 0
    %788 = vmatpush.bf16.msra.mxu0 %v779
    %789 = vmatmul.bf16.gmra.mxu0 %v776
    %v790 = vpop.f32.mrf.mxu0
    %v791 = vadd.f32 %v718, %v790
    %v792 = vpop.f32.mrf.mxu0
    %793 = vdwg.mxu0
    %v795 = vsel %vm407, %v672, 0
    %v798 = vsel %vm595, %v82, 0
    %800 = vmatpush.bf16.msra.mxu0 0
    %801 = vmatpush.bf16.msra.mxu0 0
    %802 = vmatpush.bf16.msra.mxu0 0
    %803 = vmatpush.bf16.msra.mxu0 0
    %804 = vmatpush.bf16.msra.mxu0 0
    %805 = vmatpush.bf16.msra.mxu0 0
    %806 = vmatpush.bf16.msra.mxu0 0
    %807 = vmatpush.bf16.msra.mxu0 %v798
    %808 = vmatmul.bf16.gmra.mxu0 %v795
    %v809 = vpop.f32.mrf.mxu0
    %v810 = vadd.f32 %v734, %v809
    %v811 = vpop.f32.mrf.mxu0
    %812 = vdwg.mxu0
    %vm813 = vcmask 523264
    %v814 = vsel %vm813, %v753, 0.0
    %v815 = vsel %vm813, %v772, 0.0
    %v816 = vadd.f32 %v814, %v815
    %v817 = vsel %vm813, %v791, 0.0
    %v818 = vadd.f32 %v816, %v817
    %v819 = vsel %vm813, %v810, 0.0
    %v820 = vadd.f32 %v818, %v819
    %v822 = vperm.slane %v87, 0
    %v824 = vadd.f32 %v820, %v822
    %v825 = vxor.u32 %v824, 2147483648
    %v826 = vmul.f32 %v825, 1.442695
    %v827 = vpow.pop %v826
    %v828 = vadd.f32 %v827, 1.0
    %v829 = vrcp.pop %v828
    %v830 = vmul.f32 %v828, %v829
    %v831 = vsub.f32 1.0, %v830
    %v832 = vmul.f32 %v829, %v831
    %v833 = vadd.f32 %v829, %v832
    %vm834 = vweird.f32 %v828
    %vm835 = vweird.f32 %v829
    %vm836 = vmor %vm834, %vm835
    %v837 = vsel %vm836, %v829, %v833
    %v838 = vand.u32 2147483647, %v828
    %vm839 = vcmp.eq.f32.partialorder %v838, 8.507059e+37
    %v840 = vand.u32 %v828, 2147483648
    %v841 = vor.u32 1.1754944e-38, %v840
    %v842 = vsel %vm839, %v841, %v837
    %v843 = vmul.f32 1.0, %v842
    %845 = vrot.lane.b32.xlu0 %v843, 96
    %v846 = vpop.permute.xlu0 %845
    %v848 = vmul.f32 %v824, %v846
    %849 = vst.msk [vmem:[#allocation2] sm:$0xff] %vm104, %v848
    %s850 = scalar_lea.vmem %s0, 8
    %v851 = vld [vmem:[%s850] sm:$0xff]
    %v852 = vpack.c.bf16 %v851, %v851
    %s853 = scalar_lea.vmem %s1, 8
    %v854 = vld [vmem:[%s853] sm:$0xff]
    %v855 = vpack.c.bf16 %v854, %v854
    %v857 = vsel %vm104, %v852, 0
    %859 = vmatpush.bf16.msra.mxu0 0
    %860 = vmatpush.bf16.msra.mxu0 0
    %861 = vmatpush.bf16.msra.mxu0 0
    %862 = vmatpush.bf16.msra.mxu0 0
    %863 = vmatpush.bf16.msra.mxu0 0
    %864 = vmatpush.bf16.msra.mxu0 0
    %865 = vmatpush.bf16.msra.mxu0 %v101
    %866 = vmatpush.bf16.msra.mxu0 %v100
    %867 = vmatmul.bf16.gmra.mxu0 %v857
    %v868 = vpop.f32.mrf.mxu0
    %v869 = vadd.f32 0.0, %v868
    %v870 = vpop.f32.mrf.mxu0
    %871 = vdwg.mxu0
    %872 = vmatpush.bf16.msra.mxu0 0
    %873 = vmatpush.bf16.msra.mxu0 0
    %874 = vmatpush.bf16.msra.mxu0 0
    %875 = vmatpush.bf16.msra.mxu0 0
    %876 = vmatpush.bf16.msra.mxu0 0
    %877 = vmatpush.bf16.msra.mxu0 0
    %878 = vmatpush.bf16.msra.mxu0 %v130
    %879 = vmatpush.bf16.msra.mxu0 %v129
    %880 = vmatmul.bf16.gmra.mxu0 %v857
    %v881 = vpop.f32.mrf.mxu0
    %v882 = vadd.f32 0.0, %v881
    %v883 = vpop.f32.mrf.mxu0
    %884 = vdwg.mxu0
    %885 = vmatpush.bf16.msra.mxu0 0
    %886 = vmatpush.bf16.msra.mxu0 0
    %887 = vmatpush.bf16.msra.mxu0 0
    %888 = vmatpush.bf16.msra.mxu0 0
    %889 = vmatpush.bf16.msra.mxu0 0
    %890 = vmatpush.bf16.msra.mxu0 0
    %891 = vmatpush.bf16.msra.mxu0 %v155
    %892 = vmatpush.bf16.msra.mxu0 %v154
    %893 = vmatmul.bf16.gmra.mxu0 %v857
    %v894 = vpop.f32.mrf.mxu0
    %v895 = vadd.f32 0.0, %v894
    %v896 = vpop.f32.mrf.mxu0
    %897 = vdwg.mxu0
    %898 = vmatpush.bf16.msra.mxu0 0
    %899 = vmatpush.bf16.msra.mxu0 0
    %900 = vmatpush.bf16.msra.mxu0 0
    %901 = vmatpush.bf16.msra.mxu0 0
    %902 = vmatpush.bf16.msra.mxu0 0
    %903 = vmatpush.bf16.msra.mxu0 0
    %904 = vmatpush.bf16.msra.mxu0 %v180
    %905 = vmatpush.bf16.msra.mxu0 %v179
    %906 = vmatmul.bf16.gmra.mxu0 %v857
    %v907 = vpop.f32.mrf.mxu0
    %v908 = vadd.f32 0.0, %v907
    %v909 = vpop.f32.mrf.mxu0
    %910 = vdwg.mxu0
    %v912 = vsel %vm104, %v855, 0
    %914 = vmatpush.bf16.msra.mxu0 0
    %915 = vmatpush.bf16.msra.mxu0 0
    %916 = vmatpush.bf16.msra.mxu0 0
    %917 = vmatpush.bf16.msra.mxu0 0
    %918 = vmatpush.bf16.msra.mxu0 0
    %919 = vmatpush.bf16.msra.mxu0 0
    %920 = vmatpush.bf16.msra.mxu0 %v205
    %921 = vmatpush.bf16.msra.mxu0 %v204
    %922 = vmatmul.bf16.gmra.mxu0 %v912
    %v923 = vpop.f32.mrf.mxu0
    %v924 = vadd.f32 0.0, %v923
    %v925 = vpop.f32.mrf.mxu0
    %926 = vdwg.mxu0
    %927 = vmatpush.bf16.msra.mxu0 0
    %928 = vmatpush.bf16.msra.mxu0 0
    %929 = vmatpush.bf16.msra.mxu0 0
    %930 = vmatpush.bf16.msra.mxu0 0
    %931 = vmatpush.bf16.msra.mxu0 0
    %932 = vmatpush.bf16.msra.mxu0 0
    %933 = vmatpush.bf16.msra.mxu0 %v233
    %934 = vmatpush.bf16.msra.mxu0 %v232
    %935 = vmatmul.bf16.gmra.mxu0 %v912
    %v936 = vpop.f32.mrf.mxu0
    %v937 = vadd.f32 0.0, %v936
    %v938 = vpop.f32.mrf.mxu0
    %939 = vdwg.mxu0
    %940 = vmatpush.bf16.msra.mxu0 0
    %941 = vmatpush.bf16.msra.mxu0 0
    %942 = vmatpush.bf16.msra.mxu0 0
    %943 = vmatpush.bf16.msra.mxu0 0
    %944 = vmatpush.bf16.msra.mxu0 0
    %945 = vmatpush.bf16.msra.mxu0 0
    %946 = vmatpush.bf16.msra.mxu0 %v258
    %947 = vmatpush.bf16.msra.mxu0 %v257
    %948 = vmatmul.bf16.gmra.mxu0 %v912
    %v949 = vpop.f32.mrf.mxu0
    %v950 = vadd.f32 0.0, %v949
    %v951 = vpop.f32.mrf.mxu0
    %952 = vdwg.mxu0
    %953 = vmatpush.bf16.msra.mxu0 0
    %954 = vmatpush.bf16.msra.mxu0 0
    %955 = vmatpush.bf16.msra.mxu0 0
    %956 = vmatpush.bf16.msra.mxu0 0
    %957 = vmatpush.bf16.msra.mxu0 0
    %958 = vmatpush.bf16.msra.mxu0 0
    %959 = vmatpush.bf16.msra.mxu0 %v283
    %960 = vmatpush.bf16.msra.mxu0 %v282
    %961 = vmatmul.bf16.gmra.mxu0 %v912
    %v962 = vpop.f32.mrf.mxu0
    %v963 = vadd.f32 0.0, %v962
    %v964 = vpop.f32.mrf.mxu0
    %965 = vdwg.mxu0
    %966 = vmatpush.bf16.msra.mxu0 0
    %967 = vmatpush.bf16.msra.mxu0 0
    %968 = vmatpush.bf16.msra.mxu0 0
    %969 = vmatpush.bf16.msra.mxu0 0
    %970 = vmatpush.bf16.msra.mxu0 0
    %971 = vmatpush.bf16.msra.mxu0 0
    %972 = vmatpush.bf16.msra.mxu0 %v308
    %973 = vmatpush.bf16.msra.mxu0 %v307
    %974 = vmatmul.bf16.gmra.mxu0 %v912
    %v975 = vpop.f32.mrf.mxu0
    %v976 = vadd.f32 0.0, %v975
    %v977 = vpop.f32.mrf.mxu0
    %978 = vdwg.mxu0
    %979 = vmatpush.bf16.msra.mxu0 0
    %980 = vmatpush.bf16.msra.mxu0 0
    %981 = vmatpush.bf16.msra.mxu0 0
    %982 = vmatpush.bf16.msra.mxu0 0
    %983 = vmatpush.bf16.msra.mxu0 0
    %984 = vmatpush.bf16.msra.mxu0 0
    %985 = vmatpush.bf16.msra.mxu0 %v333
    %986 = vmatpush.bf16.msra.mxu0 %v332
    %987 = vmatmul.bf16.gmra.mxu0 %v912
    %v988 = vpop.f32.mrf.mxu0
    %v989 = vadd.f32 0.0, %v988
    %v990 = vpop.f32.mrf.mxu0
    %991 = vdwg.mxu0
    %992 = vmatpush.bf16.msra.mxu0 0
    %993 = vmatpush.bf16.msra.mxu0 0
    %994 = vmatpush.bf16.msra.mxu0 0
    %995 = vmatpush.bf16.msra.mxu0 0
    %996 = vmatpush.bf16.msra.mxu0 0
    %997 = vmatpush.bf16.msra.mxu0 0
    %998 = vmatpush.bf16.msra.mxu0 %v358
    %999 = vmatpush.bf16.msra.mxu0 %v357
    %1000 = vmatmul.bf16.gmra.mxu0 %v912
    %v1001 = vpop.f32.mrf.mxu0
    %v1002 = vadd.f32 0.0, %v1001
    %v1003 = vpop.f32.mrf.mxu0
    %1004 = vdwg.mxu0
    %1005 = vmatpush.bf16.msra.mxu0 0
    %1006 = vmatpush.bf16.msra.mxu0 0
    %1007 = vmatpush.bf16.msra.mxu0 0
    %1008 = vmatpush.bf16.msra.mxu0 0
    %1009 = vmatpush.bf16.msra.mxu0 0
    %1010 = vmatpush.bf16.msra.mxu0 0
    %1011 = vmatpush.bf16.msra.mxu0 %v383
    %1012 = vmatpush.bf16.msra.mxu0 %v382
    %1013 = vmatmul.bf16.gmra.mxu0 %v912
    %v1014 = vpop.f32.mrf.mxu0
    %v1015 = vadd.f32 0.0, %v1014
    %v1016 = vpop.f32.mrf.mxu0
    %1017 = vdwg.mxu0
    %v1018 = vpack.c.bf16 %v869, %v869
    %v1019 = vpack.c.bf16 %v882, %v882
    %v1020 = vpack.c.bf16 %v895, %v895
    %v1021 = vpack.c.bf16 %v908, %v908
    %v1022 = vpack.c.bf16 %v924, %v924
    %v1023 = vpack.c.bf16 %v937, %v937
    %v1024 = vpack.c.bf16 %v950, %v950
    %v1025 = vpack.c.bf16 %v963, %v963
    %v1027 = vsel %vm407, %v1018, 0
    %v1030 = vsel %vm407, %v1022, 0
    %1032 = vmatpush.bf16.xpose.msra.mxu0 0
    %1033 = vmatpush.bf16.xpose.msra.mxu0 0
    %1034 = vmatpush.bf16.xpose.msra.mxu0 0
    %1035 = vmatpush.bf16.xpose.msra.mxu0 0
    %1036 = vmatpush.bf16.xpose.msra.mxu0 0
    %1037 = vmatpush.bf16.xpose.msra.mxu0 0
    %1038 = vmatpush.bf16.xpose.msra.mxu0 0
    %1039 = vmatpush.bf16.xpose.msra.mxu0 %v1030
    %1040 = vmatmul.bf16.gmra.mxu0 %v1027
    %v1041 = vpop.f32.mrf.mxu0
    %v1042 = vadd.f32 0.0, %v1041
    %v1043 = vpop.f32.mrf.mxu0
    %1044 = vdwg.mxu0
    %v1046 = vsel %vm407, %v1019, 0
    %v1049 = vsel %vm407, %v1023, 0
    %1051 = vmatpush.bf16.xpose.msra.mxu0 0
    %1052 = vmatpush.bf16.xpose.msra.mxu0 0
    %1053 = vmatpush.bf16.xpose.msra.mxu0 0
    %1054 = vmatpush.bf16.xpose.msra.mxu0 0
    %1055 = vmatpush.bf16.xpose.msra.mxu0 0
    %1056 = vmatpush.bf16.xpose.msra.mxu0 0
    %1057 = vmatpush.bf16.xpose.msra.mxu0 0
    %1058 = vmatpush.bf16.xpose.msra.mxu0 %v1049
    %1059 = vmatmul.bf16.gmra.mxu0 %v1046
    %v1060 = vpop.f32.mrf.mxu0
    %v1061 = vadd.f32 0.0, %v1060
    %v1062 = vpop.f32.mrf.mxu0
    %1063 = vdwg.mxu0
    %v1065 = vsel %vm407, %v1020, 0
    %v1068 = vsel %vm407, %v1024, 0
    %1070 = vmatpush.bf16.xpose.msra.mxu0 0
    %1071 = vmatpush.bf16.xpose.msra.mxu0 0
    %1072 = vmatpush.bf16.xpose.msra.mxu0 0
    %1073 = vmatpush.bf16.xpose.msra.mxu0 0
    %1074 = vmatpush.bf16.xpose.msra.mxu0 0
    %1075 = vmatpush.bf16.xpose.msra.mxu0 0
    %1076 = vmatpush.bf16.xpose.msra.mxu0 0
    %1077 = vmatpush.bf16.xpose.msra.mxu0 %v1068
    %1078 = vmatmul.bf16.gmra.mxu0 %v1065
    %v1079 = vpop.f32.mrf.mxu0
    %v1080 = vadd.f32 0.0, %v1079
    %v1081 = vpop.f32.mrf.mxu0
    %1082 = vdwg.mxu0
    %v1084 = vsel %vm407, %v1021, 0
    %v1087 = vsel %vm407, %v1025, 0
    %1089 = vmatpush.bf16.xpose.msra.mxu0 0
    %1090 = vmatpush.bf16.xpose.msra.mxu0 0
    %1091 = vmatpush.bf16.xpose.msra.mxu0 0
    %1092 = vmatpush.bf16.xpose.msra.mxu0 0
    %1093 = vmatpush.bf16.xpose.msra.mxu0 0
    %1094 = vmatpush.bf16.xpose.msra.mxu0 0
    %1095 = vmatpush.bf16.xpose.msra.mxu0 0
    %1096 = vmatpush.bf16.xpose.msra.mxu0 %v1087
    %1097 = vmatmul.bf16.gmra.mxu0 %v1084
    %v1098 = vpop.f32.mrf.mxu0
    %v1099 = vadd.f32 0.0, %v1098
    %v1100 = vpop.f32.mrf.mxu0
    %1101 = vdwg.mxu0
    %v1102 = vmul.f32 %v1042, 0.35355338
    %v1103 = vmul.f32 %v1061, 0.35355338
    %v1104 = vmul.f32 %v1080, 0.35355338
    %v1105 = vmul.f32 %v1099, 0.35355338
    %v1106 = vsel %vm407, %v1102, -inf
    %1107 = vmax.xlane.f32.xlu0 %v1106
    %v1108 = vpop.xlane.xlu0 %1107
    %v1109 = vsel %vm407, %v1103, -inf
    %1110 = vmax.xlane.f32.xlu0 %v1109
    %v1111 = vpop.xlane.xlu0 %1110
    %v1112 = vsel %vm407, %v1104, -inf
    %1113 = vmax.xlane.f32.xlu0 %v1112
    %v1114 = vpop.xlane.xlu0 %1113
    %v1115 = vsel %vm407, %v1105, -inf
    %1116 = vmax.xlane.f32.xlu0 %v1115
    %v1117 = vpop.xlane.xlu0 %1116
    %v1118 = vsub.f32 %v1102, %v1108
    %v1119 = vsub.f32 %v1103, %v1111
    %v1120 = vsub.f32 %v1104, %v1114
    %v1121 = vsub.f32 %v1105, %v1117
    %v1122 = vmul.f32 %v1118, 1.442695
    %v1123 = vpow.pop %v1122
    %v1124 = vmul.f32 %v1119, 1.442695
    %v1125 = vpow.pop %v1124
    %v1126 = vmul.f32 %v1120, 1.442695
    %v1127 = vpow.pop %v1126
    %v1128 = vmul.f32 %v1121, 1.442695
    %v1129 = vpow.pop %v1128
    %v1130 = vsel %vm407, %v1123, 0.0
    %1131 = vadd.xlane.f32.xlu0 %v1130
    %v1132 = vpop.xlane.xlu0 %1131
    %v1133 = vsel %vm407, %v1125, 0.0
    %1134 = vadd.xlane.f32.xlu0 %v1133
    %v1135 = vpop.xlane.xlu0 %1134
    %v1136 = vsel %vm407, %v1127, 0.0
    %1137 = vadd.xlane.f32.xlu0 %v1136
    %v1138 = vpop.xlane.xlu0 %1137
    %v1139 = vsel %vm407, %v1129, 0.0
    %1140 = vadd.xlane.f32.xlu0 %v1139
    %v1141 = vpop.xlane.xlu0 %1140
    %v1142 = vrcp.pop %v1132
    %v1143 = vmul.f32 %v1132, %v1142
    %v1144 = vsub.f32 1.0, %v1143
    %v1145 = vmul.f32 %v1142, %v1144
    %v1146 = vadd.f32 %v1142, %v1145
    %vm1147 = vweird.f32 %v1132
    %vm1148 = vweird.f32 %v1142
    %vm1149 = vmor %vm1147, %vm1148
    %v1150 = vsel %vm1149, %v1142, %v1146
    %v1151 = vand.u32 2147483647, %v1132
    %vm1152 = vcmp.eq.f32.partialorder %v1151, 8.507059e+37
    %v1153 = vand.u32 %v1132, 2147483648
    %v1154 = vor.u32 1.1754944e-38, %v1153
    %v1155 = vsel %vm1152, %v1154, %v1150
    %v1156 = vrcp.pop %v1135
    %v1157 = vmul.f32 %v1135, %v1156
    %v1158 = vsub.f32 1.0, %v1157
    %v1159 = vmul.f32 %v1156, %v1158
    %v1160 = vadd.f32 %v1156, %v1159
    %vm1161 = vweird.f32 %v1135
    %vm1162 = vweird.f32 %v1156
    %vm1163 = vmor %vm1161, %vm1162
    %v1164 = vsel %vm1163, %v1156, %v1160
    %v1165 = vand.u32 2147483647, %v1135
    %vm1166 = vcmp.eq.f32.partialorder %v1165, 8.507059e+37
    %v1167 = vand.u32 %v1135, 2147483648
    %v1168 = vor.u32 1.1754944e-38, %v1167
    %v1169 = vsel %vm1166, %v1168, %v1164
    %v1170 = vrcp.pop %v1138
    %v1171 = vmul.f32 %v1138, %v1170
    %v1172 = vsub.f32 1.0, %v1171
    %v1173 = vmul.f32 %v1170, %v1172
    %v1174 = vadd.f32 %v1170, %v1173
    %vm1175 = vweird.f32 %v1138
    %vm1176 = vweird.f32 %v1170
    %vm1177 = vmor %vm1175, %vm1176
    %v1178 = vsel %vm1177, %v1170, %v1174
    %v1179 = vand.u32 2147483647, %v1138
    %vm1180 = vcmp.eq.f32.partialorder %v1179, 8.507059e+37
    %v1181 = vand.u32 %v1138, 2147483648
    %v1182 = vor.u32 1.1754944e-38, %v1181
    %v1183 = vsel %vm1180, %v1182, %v1178
    %v1184 = vrcp.pop %v1141
    %v1185 = vmul.f32 %v1141, %v1184
    %v1186 = vsub.f32 1.0, %v1185
    %v1187 = vmul.f32 %v1184, %v1186
    %v1188 = vadd.f32 %v1184, %v1187
    %vm1189 = vweird.f32 %v1141
    %vm1190 = vweird.f32 %v1184
    %vm1191 = vmor %vm1189, %vm1190
    %v1192 = vsel %vm1191, %v1184, %v1188
    %v1193 = vand.u32 2147483647, %v1141
    %vm1194 = vcmp.eq.f32.partialorder %v1193, 8.507059e+37
    %v1195 = vand.u32 %v1141, 2147483648
    %v1196 = vor.u32 1.1754944e-38, %v1195
    %v1197 = vsel %vm1194, %v1196, %v1192
    %v1198 = vmul.f32 %v1123, %v1155
    %v1199 = vmul.f32 %v1125, %v1169
    %v1200 = vmul.f32 %v1127, %v1183
    %v1201 = vmul.f32 %v1129, %v1197
    %v1202 = vpack.c.bf16 %v1198, %v1198
    %v1203 = vpack.c.bf16 %v1199, %v1199
    %v1204 = vpack.c.bf16 %v1200, %v1200
    %v1205 = vpack.c.bf16 %v1201, %v1201
    %v1206 = vpack.c.bf16 %v976, %v976
    %v1207 = vpack.c.bf16 %v989, %v989
    %v1208 = vpack.c.bf16 %v1002, %v1002
    %v1209 = vpack.c.bf16 %v1015, %v1015
    %v1211 = vsel %vm407, %v1202, 0
    %v1214 = vsel %vm595, %v1206, 0
    %1216 = vmatpush.bf16.msra.mxu0 0
    %1217 = vmatpush.bf16.msra.mxu0 0
    %1218 = vmatpush.bf16.msra.mxu0 0
    %1219 = vmatpush.bf16.msra.mxu0 0
    %1220 = vmatpush.bf16.msra.mxu0 0
    %1221 = vmatpush.bf16.msra.mxu0 0
    %1222 = vmatpush.bf16.msra.mxu0 0
    %1223 = vmatpush.bf16.msra.mxu0 %v1214
    %1224 = vmatmul.bf16.gmra.mxu0 %v1211
    %v1225 = vpop.f32.mrf.mxu0
    %v1226 = vadd.f32 0.0, %v1225
    %v1227 = vpop.f32.mrf.mxu0
    %1228 = vdwg.mxu0
    %v1230 = vsel %vm407, %v1203, 0
    %v1233 = vsel %vm595, %v1207, 0
    %1235 = vmatpush.bf16.msra.mxu0 0
    %1236 = vmatpush.bf16.msra.mxu0 0
    %1237 = vmatpush.bf16.msra.mxu0 0
    %1238 = vmatpush.bf16.msra.mxu0 0
    %1239 = vmatpush.bf16.msra.mxu0 0
    %1240 = vmatpush.bf16.msra.mxu0 0
    %1241 = vmatpush.bf16.msra.mxu0 0
    %1242 = vmatpush.bf16.msra.mxu0 %v1233
    %1243 = vmatmul.bf16.gmra.mxu0 %v1230
    %v1244 = vpop.f32.mrf.mxu0
    %v1245 = vadd.f32 0.0, %v1244
    %v1246 = vpop.f32.mrf.mxu0
    %1247 = vdwg.mxu0
    %v1249 = vsel %vm407, %v1204, 0
    %v1252 = vsel %vm595, %v1208, 0
    %1254 = vmatpush.bf16.msra.mxu0 0
    %1255 = vmatpush.bf16.msra.mxu0 0
    %1256 = vmatpush.bf16.msra.mxu0 0
    %1257 = vmatpush.bf16.msra.mxu0 0
    %1258 = vmatpush.bf16.msra.mxu0 0
    %1259 = vmatpush.bf16.msra.mxu0 0
    %1260 = vmatpush.bf16.msra.mxu0 0
    %1261 = vmatpush.bf16.msra.mxu0 %v1252
    %1262 = vmatmul.bf16.gmra.mxu0 %v1249
    %v1263 = vpop.f32.mrf.mxu0
    %v1264 = vadd.f32 0.0, %v1263
    %v1265 = vpop.f32.mrf.mxu0
    %1266 = vdwg.mxu0
    %v1268 = vsel %vm407, %v1205, 0
    %v1271 = vsel %vm595, %v1209, 0
    %1273 = vmatpush.bf16.msra.mxu0 0
    %1274 = vmatpush.bf16.msra.mxu0 0
    %1275 = vmatpush.bf16.msra.mxu0 0
    %1276 = vmatpush.bf16.msra.mxu0 0
    %1277 = vmatpush.bf16.msra.mxu0 0
    %1278 = vmatpush.bf16.msra.mxu0 0
    %1279 = vmatpush.bf16.msra.mxu0 0
    %1280 = vmatpush.bf16.msra.mxu0 %v1271
    %1281 = vmatmul.bf16.gmra.mxu0 %v1268
    %v1282 = vpop.f32.mrf.mxu0
    %v1283 = vadd.f32 0.0, %v1282
    %v1284 = vpop.f32.mrf.mxu0
    %1285 = vdwg.mxu0
    %v1286 = vpack.c.bf16 %v1226, %v1226
    %v1287 = vpack.c.bf16 %v1245, %v1245
    %v1288 = vpack.c.bf16 %v1264, %v1264
    %v1289 = vpack.c.bf16 %v1283, %v1283
    %1290 = vmatpush.bf16.msra.mxu0 0
    %1291 = vmatpush.bf16.msra.mxu0 0
    %1292 = vmatpush.bf16.msra.mxu0 0
    %1293 = vmatpush.bf16.msra.mxu0 0
    %1294 = vmatpush.bf16.msra.mxu0 0
    %1295 = vmatpush.bf16.msra.mxu0 0
    %1296 = vmatpush.bf16.msra.mxu0 0
    %1297 = vmatpush.bf16.msra.mxu0 %v674
    %1298 = vmatmul.bf16.gmra.mxu0 %v1027
    %v1299 = vpop.f32.mrf.mxu0
    %v1300 = vadd.f32 0.0, %v1299
    %v1301 = vpop.f32.mrf.mxu0
    %1302 = vdwg.mxu0
    %1303 = vmatpush.bf16.msra.mxu0 0
    %1304 = vmatpush.bf16.msra.mxu0 0
    %1305 = vmatpush.bf16.msra.mxu0 0
    %1306 = vmatpush.bf16.msra.mxu0 0
    %1307 = vmatpush.bf16.msra.mxu0 0
    %1308 = vmatpush.bf16.msra.mxu0 0
    %1309 = vmatpush.bf16.msra.mxu0 0
    %1310 = vmatpush.bf16.msra.mxu0 %v690
    %1311 = vmatmul.bf16.gmra.mxu0 %v1046
    %v1312 = vpop.f32.mrf.mxu0
    %v1313 = vadd.f32 0.0, %v1312
    %v1314 = vpop.f32.mrf.mxu0
    %1315 = vdwg.mxu0
    %1316 = vmatpush.bf16.msra.mxu0 0
    %1317 = vmatpush.bf16.msra.mxu0 0
    %1318 = vmatpush.bf16.msra.mxu0 0
    %1319 = vmatpush.bf16.msra.mxu0 0
    %1320 = vmatpush.bf16.msra.mxu0 0
    %1321 = vmatpush.bf16.msra.mxu0 0
    %1322 = vmatpush.bf16.msra.mxu0 0
    %1323 = vmatpush.bf16.msra.mxu0 %v706
    %1324 = vmatmul.bf16.gmra.mxu0 %v1065
    %v1325 = vpop.f32.mrf.mxu0
    %v1326 = vadd.f32 0.0, %v1325
    %v1327 = vpop.f32.mrf.mxu0
    %1328 = vdwg.mxu0
    %1329 = vmatpush.bf16.msra.mxu0 0
    %1330 = vmatpush.bf16.msra.mxu0 0
    %1331 = vmatpush.bf16.msra.mxu0 0
    %1332 = vmatpush.bf16.msra.mxu0 0
    %1333 = vmatpush.bf16.msra.mxu0 0
    %1334 = vmatpush.bf16.msra.mxu0 0
    %1335 = vmatpush.bf16.msra.mxu0 0
    %1336 = vmatpush.bf16.msra.mxu0 %v722
    %1337 = vmatmul.bf16.gmra.mxu0 %v1084
    %v1338 = vpop.f32.mrf.mxu0
    %v1339 = vadd.f32 0.0, %v1338
    %v1340 = vpop.f32.mrf.mxu0
    %1341 = vdwg.mxu0
    %v1343 = vsel %vm407, %v1286, 0
    %1345 = vmatpush.bf16.msra.mxu0 0
    %1346 = vmatpush.bf16.msra.mxu0 0
    %1347 = vmatpush.bf16.msra.mxu0 0
    %1348 = vmatpush.bf16.msra.mxu0 0
    %1349 = vmatpush.bf16.msra.mxu0 0
    %1350 = vmatpush.bf16.msra.mxu0 0
    %1351 = vmatpush.bf16.msra.mxu0 0
    %1352 = vmatpush.bf16.msra.mxu0 %v741
    %1353 = vmatmul.bf16.gmra.mxu0 %v1343
    %v1354 = vpop.f32.mrf.mxu0
    %v1355 = vadd.f32 %v1300, %v1354
    %v1356 = vpop.f32.mrf.mxu0
    %1357 = vdwg.mxu0
    %v1359 = vsel %vm407, %v1287, 0
    %1361 = vmatpush.bf16.msra.mxu0 0
    %1362 = vmatpush.bf16.msra.mxu0 0
    %1363 = vmatpush.bf16.msra.mxu0 0
    %1364 = vmatpush.bf16.msra.mxu0 0
    %1365 = vmatpush.bf16.msra.mxu0 0
    %1366 = vmatpush.bf16.msra.mxu0 0
    %1367 = vmatpush.bf16.msra.mxu0 0
    %1368 = vmatpush.bf16.msra.mxu0 %v760
    %1369 = vmatmul.bf16.gmra.mxu0 %v1359
    %v1370 = vpop.f32.mrf.mxu0
    %v1371 = vadd.f32 %v1313, %v1370
    %v1372 = vpop.f32.mrf.mxu0
    %1373 = vdwg.mxu0
    %v1375 = vsel %vm407, %v1288, 0
    %1377 = vmatpush.bf16.msra.mxu0 0
    %1378 = vmatpush.bf16.msra.mxu0 0
    %1379 = vmatpush.bf16.msra.mxu0 0
    %1380 = vmatpush.bf16.msra.mxu0 0
    %1381 = vmatpush.bf16.msra.mxu0 0
    %1382 = vmatpush.bf16.msra.mxu0 0
    %1383 = vmatpush.bf16.msra.mxu0 0
    %1384 = vmatpush.bf16.msra.mxu0 %v779
    %1385 = vmatmul.bf16.gmra.mxu0 %v1375
    %v1386 = vpop.f32.mrf.mxu0
    %v1387 = vadd.f32 %v1326, %v1386
    %v1388 = vpop.f32.mrf.mxu0
    %1389 = vdwg.mxu0
    %v1391 = vsel %vm407, %v1289, 0
    %1393 = vmatpush.bf16.msra.mxu0 0
    %1394 = vmatpush.bf16.msra.mxu0 0
    %1395 = vmatpush.bf16.msra.mxu0 0
    %1396 = vmatpush.bf16.msra.mxu0 0
    %1397 = vmatpush.bf16.msra.mxu0 0
    %1398 = vmatpush.bf16.msra.mxu0 0
    %1399 = vmatpush.bf16.msra.mxu0 0
    %1400 = vmatpush.bf16.msra.mxu0 %v798
    %1401 = vmatmul.bf16.gmra.mxu0 %v1391
    %v1402 = vpop.f32.mrf.mxu0
    %v1403 = vadd.f32 %v1339, %v1402
    %v1404 = vpop.f32.mrf.mxu0
    %1405 = vdwg.mxu0
    %v1406 = vsel %vm813, %v1355, 0.0
    %v1407 = vsel %vm813, %v1371, 0.0
    %v1408 = vadd.f32 %v1406, %v1407
    %v1409 = vsel %vm813, %v1387, 0.0
    %v1410 = vadd.f32 %v1408, %v1409
    %v1411 = vsel %vm813, %v1403, 0.0
    %v1412 = vadd.f32 %v1410, %v1411
    %v1413 = vadd.f32 %v1412, %v822
    %v1414 = vxor.u32 %v1413, 2147483648
    %v1415 = vmul.f32 %v1414, 1.442695
    %v1416 = vpow.pop %v1415
    %v1417 = vadd.f32 %v1416, 1.0
    %v1418 = vrcp.pop %v1417
    %v1419 = vmul.f32 %v1417, %v1418
    %v1420 = vsub.f32 1.0, %v1419
    %v1421 = vmul.f32 %v1418, %v1420
    %v1422 = vadd.f32 %v1418, %v1421
    %vm1423 = vweird.f32 %v1417
    %vm1424 = vweird.f32 %v1418
    %vm1425 = vmor %vm1423, %vm1424
    %v1426 = vsel %vm1425, %v1418, %v1422
    %v1427 = vand.u32 2147483647, %v1417
    %vm1428 = vcmp.eq.f32.partialorder %v1427, 8.507059e+37
    %v1429 = vand.u32 %v1417, 2147483648
    %v1430 = vor.u32 1.1754944e-38, %v1429
    %v1431 = vsel %vm1428, %v1430, %v1426
    %v1432 = vmul.f32 1.0, %v1431
    %1434 = vrot.lane.b32.xlu0 %v1432, 96
    %v1435 = vpop.permute.xlu0 %1434
    %v1437 = vmul.f32 %v1413, %v1435
    %s1438 = scalar_lea.vmem [#allocation2], 8
    %1439 = vst.msk [vmem:[%s1438] sm:$0xff] %vm104, %v1437
    // Predicated region
    $region34: #{tpu_custom_call.1} parent=1 // pred_check
      _
    $region35: #{tpu_custom_call.1} parent=1 // pred_check_branch
      %1441 = sbr.rel (0) target = $region37
    $region36: #{tpu_custom_call.1} parent=1 // pred_region
      %1443 = vsyncadd [#allocation3], 0
      %s1444 = sshll.u32 [#allocation2], 4
      %s1445 = int_to_ptr.vmem [resolvable:$true] %s1444
      %s1446 = sshll.u32 %s8, 4
      %s1447 = int_to_ptr.hbm [resolvable:$true] %s1446
      %1452 = dma.vmem_to_hbm [thread:$0]  %s1445, 256, %s1447, [#allocation3], 128, 128, 8
    $region37: #{tpu_custom_call.1} parent=1 // pred_fallthru
      _
    // Predicated region
    $region38: #{tpu_custom_call.1} parent=1 // pred_check
      _
    $region39: #{tpu_custom_call.1} parent=1 // pred_check_branch
      %1454 = sbr.rel (0) target = $region41
    $region40: #{tpu_custom_call.1} parent=1 // pred_region
      %1456 = dma.done [#allocation3], 256
    $region41: #{tpu_custom_call.1} parent=1 // pred_fallthru
      _
    %1457 = vsyncpa [#allocation3], 1

</llo_original>
